<compile_context>
chip_gen: v6e
topology: v6e:2x2x1
jax: 0.10.0
libtpu: 0.0.40
codegen_flags: <defaults>
</compile_context>

<pallas_src>
import jax
import jax.numpy as jnp
import numpy as np
from jax.experimental import pallas as pl
from jax.experimental.pallas import tpu as pltpu


# ---------------------------------------------------------------------------
# Fused Pallas kernel
# ---------------------------------------------------------------------------
def _cnn_fused_kernel(x_ref, band1_ref, b1_ref, band2_ref, b2_ref,
                      wfc_ref, fcb_ref, out_ref, pool1_ref, p2_ref):
    f32 = jnp.float32
    tb = out_ref.shape[0]          # images handled in this grid step (static)
    n1 = tb * 14                   # conv1 pooled rows in this tile (no garbage)
    n2 = tb * 7                    # conv2 pooled rows in this tile

    # ---- conv1 (3x3, pad 1) + fused bias/ReLU/2x2-maxpool -------------------
    # x block rows: [1 zero row, tb*28 raw image rows, >=2 zero tail rows],
    # width padded 28 -> 32.  Vertical per-image padding is NOT materialised:
    # the first tap of even output rows and the last tap of odd output rows are
    # the only ones that can cross an image boundary, and they are zero-masked.
    x_sh = [x_ref[pl.ds(off, n1, stride=2), :] for off in range(4)]
    row1 = jax.lax.broadcasted_iota(jnp.int32, (n1, 1), 0) % 14
    x0 = jnp.where(row1 == 0, 0.0, x_sh[0])      # top-pad row of each image
    x3 = jnp.where(row1 == 13, 0.0, x_sh[3])     # bottom-pad row of each image
    w1 = [band1_ref[di * 32:(di + 1) * 32, :] for di in range(3)]

    a_even = (jnp.dot(x0,      w1[0], preferred_element_type=f32)
              + jnp.dot(x_sh[1], w1[1], preferred_element_type=f32)
              + jnp.dot(x_sh[2], w1[2], preferred_element_type=f32))
    a_odd = (jnp.dot(x_sh[1], w1[0], preferred_element_type=f32)
             + jnp.dot(x_sh[2], w1[1], preferred_element_type=f32)
             + jnp.dot(x3,      w1[2], preferred_element_type=f32))
    v1 = jnp.maximum(a_even, a_odd)                      # vertical 2x1 max
    h1 = jnp.maximum(v1[:, :128], v1[:, 128:])           # horizontal 1x2 max
    p1 = jnp.maximum(h1 + b1_ref[...], 0.0)              # bias + ReLU (commute)

    # ONE aligned contiguous store (data starts at row 8 of the scratch; the
    # pad rows around it are only ever read through the masked taps below, so
    # they never need to be initialised).
    pool1_ref[pl.ds(8, n1), :] = p1

    # ---- conv2 (3x3 on 8 ch) + fused bias/ReLU/2x2-maxpool ------------------
    p_sh = [pool1_ref[pl.ds(7 + off, n2, stride=2), :] for off in range(4)]
    row2 = jax.lax.broadcasted_iota(jnp.int32, (n2, 1), 0) % 7
    p0 = jnp.where(row2 == 0, 0.0, p_sh[0])
    p3 = jnp.where(row2 == 6, 0.0, p_sh[3])
    # Lane-aligned K-concat: one K=384 dot per parity instead of 3 K=128 dots.
    lhs_even = jnp.concatenate([p0, p_sh[1], p_sh[2]], axis=1)    # (n2, 384)
    lhs_odd = jnp.concatenate([p_sh[1], p_sh[2], p3], axis=1)     # (n2, 384)
    band2 = band2_ref[...]                                        # (384, 256)
    a2_even = jnp.dot(lhs_even, band2, preferred_element_type=f32)
    a2_odd = jnp.dot(lhs_odd, band2, preferred_element_type=f32)
    v2 = jnp.maximum(a2_even, a2_odd)
    h2 = jnp.maximum(v2[:, :128], v2[:, 128:])
    p2_ref[...] = jnp.maximum(h2 + b2_ref[...], 0.0)              # (tb*7, 128)

    # ---- fc1: gather the 7 pooled rows per image, ONE K=896 matmul ----------
    feats = jnp.concatenate(
        [p2_ref[pl.ds(hp, tb, stride=7), :] for hp in range(7)], axis=1)
    out_ref[...] = (jnp.dot(feats, wfc_ref[...], preferred_element_type=f32)
                    + fcb_ref[...])                               # (tb, 128)


# ---------------------------------------------------------------------------
# Host-side weight repacking (done once, outside the hot path)
# ---------------------------------------------------------------------------
def prepare_params(params):
    w1 = np.asarray(params["conv1_w"], np.float32)    # (8, 1, 3, 3)  OIHW
    b1 = np.asarray(params["conv1_b"], np.float32)    # (8,)
    w2 = np.asarray(params["conv2_w"], np.float32)    # (16, 8, 3, 3)
    b2 = np.asarray(params["conv2_b"], np.float32)    # (16,)
    wf = np.asarray(params["fc1_w"], np.float32)      # (10, 784)
    bf = np.asarray(params["fc1_b"], np.float32)      # (10,)

    # conv1 band: rows = padded input width (32), cols = packed output
    # [even output cols | odd output cols], 14*8 = 112 used of each 128.
    band1 = np.zeros((3, 32, 256), np.float32)
    for w in range(28):
        col = (w % 2) * 128 + (w // 2) * 8
        for di in range(3):
            for dj in range(3):
                win = w + dj - 1
                if 0 <= win < 28:
                    band1[di, win, col:col + 8] = w1[:, 0, di, dj]
    bias1 = np.zeros((1, 128), np.float32)
    for wp in range(14):
        bias1[0, wp * 8:wp * 8 + 8] = b1

    # conv2 band: rows = pooled1 packed lanes (14*8 = 112 used of 128),
    # cols = packed conv2 output [even | odd], 7*16 = 112 used of each 128.
    band2 = np.zeros((3, 128, 256), np.float32)
    for w in range(14):
        col = (w % 2) * 128 + (w // 2) * 16
        for di in range(3):
            for dj in range(3):
                win = w + dj - 1
                if 0 <= win < 14:
                    band2[di, win * 8:win * 8 + 8, col:col + 16] = w2[:, :, di, dj].T
    bias2 = np.zeros((1, 128), np.float32)
    for wp in range(7):
        bias2[0, wp * 16:wp * 16 + 16] = b2

    # fc1 weight re-indexed to the kernel's pooled layout
    # (row = hp*128 + wp*16 + co); classes padded 10 -> 128 (lane-dense store).
    # torch flatten order of (B, 16, 7, 7) is (co, hp, wp).
    wfc = np.zeros((7 * 128, 128), np.float32)
    wf4 = wf.reshape(10, 16, 7, 7)                    # (cls, co, hp, wp)
    for hp in range(7):
        for wp in range(7):
            r = hp * 128 + wp * 16
            wfc[r:r + 16, :10] = wf4[:, :, hp, wp].T  # (co, cls)
    fcb = np.zeros((1, 128), np.float32)
    fcb[0, :10] = bf

    return {
        "band1": jnp.asarray(band1.reshape(96, 256)),
        "b1": jnp.asarray(bias1),
        "band2": jnp.asarray(band2.reshape(384, 256)),
        "b2": jnp.asarray(bias2),
        "wfc": jnp.asarray(wfc),
        "fcb": jnp.asarray(fcb),
    }


def _pick_batch_tile(batch, max_tile=128):
    # Prefer a multiple-of-8 tile that divides the batch and leaves >= 2 grid
    # steps, so the "parallel" grid axis shards across v7x's two TensorCores.
    # The tile is capped at 128 to bound per-step VMEM (v7x has 64 MiB).
    # Small / awkward batches fall back to a single step over the whole batch.
    t = (min(max_tile, batch // 2) // 8) * 8
    while t >= 8:
        if batch % t == 0:
            return t
        t -= 8
    return batch


# ---------------------------------------------------------------------------
# Forward pass (jittable): one fused pallas_call
# ---------------------------------------------------------------------------
def cnn_forward(x, prep):
    """x: (B, 1, 28, 28) float32, NCHW as in the PyTorch module."""
    batch, cin, height, width = x.shape
    assert cin == 1 and height == 28 and width == 28
    tb = _pick_batch_tile(batch)
    nt = batch // tb
    r1 = tb * 28 + 8                       # rows per input tile (mult. of 8)
    p1r = (tb * 14 + 9 + 7) // 8 * 8       # pooled-1 scratch rows

    # Single pad: per batch-tile slab = [1 zero row, tb*28 raw image rows,
    # 7 zero rows], width 28 -> 32.  No per-image padding (handled in-kernel
    # by tap masking), so the padded copy is only ~15% larger than x.
    ximg = x.reshape(nt, tb * 28, 28)
    ximg = jnp.pad(ximg, ((0, 0), (1, 7), (0, 4)))
    x2d = ximg.reshape(nt * r1, 32)

    out = pl.pallas_call(
        _cnn_fused_kernel,
        out_shape=jax.ShapeDtypeStruct((batch, 128), jnp.float32),
        grid=(nt,),
        in_specs=[
            pl.BlockSpec((r1, 32), lambda t: (t, 0)),     # input batch tile
            pl.BlockSpec((96, 256), lambda t: (0, 0)),    # conv1 bands (resident)
            pl.BlockSpec((1, 128), lambda t: (0, 0)),     # conv1 bias (packed)
            pl.BlockSpec((384, 256), lambda t: (0, 0)),   # conv2 bands (resident)
            pl.BlockSpec((1, 128), lambda t: (0, 0)),     # conv2 bias (packed)
            pl.BlockSpec((896, 128), lambda t: (0, 0)),   # fc1 weight (repacked)
            pl.BlockSpec((1, 128), lambda t: (0, 0)),     # fc1 bias (padded)
        ],
        out_specs=pl.BlockSpec((tb, 128), lambda t: (t, 0)),
        scratch_shapes=[
            pltpu.VMEM((p1r, 128), jnp.float32),          # pooled-1 staging
            pltpu.VMEM((tb * 7, 128), jnp.float32),       # pooled-2 (fc gather)
        ],
        compiler_params=pltpu.CompilerParams(
            dimension_semantics=("parallel",),
            vmem_limit_bytes=48 * 1024 * 1024),
    )(x2d, prep["band1"], prep["b1"], prep["band2"], prep["b2"],
      prep["wfc"], prep["fcb"])
    return out[:, :10]


# ---------------------------------------------------------------------------
# Params + pure-JAX reference (mirrors the PyTorch module) for validation
# ---------------------------------------------------------------------------
def init_params(key, in_channels=1, num_classes=10):
    k1, k2, k3 = jax.random.split(key, 3)
    return {
        "conv1_w": 0.1 * jax.random.normal(k1, (8, in_channels, 3, 3), jnp.float32),
        "conv1_b": jnp.linspace(-0.1, 0.1, 8, dtype=jnp.float32),
        "conv2_w": 0.1 * jax.random.normal(k2, (16, 8, 3, 3), jnp.float32),
        "conv2_b": jnp.linspace(-0.1, 0.1, 16, dtype=jnp.float32),
        "fc1_w": 0.05 * jax.random.normal(k3, (num_classes, 16 * 7 * 7), jnp.float32),
        "fc1_b": jnp.linspace(-0.1, 0.1, num_classes, dtype=jnp.float32),
    }


def reference_forward(x, params):
    def conv(x, w, b):
        y = jax.lax.conv_general_dilated(
            x, w, window_strides=(1, 1), padding=((1, 1), (1, 1)),
            dimension_numbers=("NCHW", "OIHW", "NCHW"))
        return jax.nn.relu(y + b[None, :, None, None])

    def pool(x):
        return jax.lax.reduce_window(
            x, -jnp.inf, jax.lax.max, (1, 1, 2, 2), (1, 1, 2, 2), "VALID")

    x = pool(conv(x, params["conv1_w"], params["conv1_b"]))
    x = pool(conv(x, params["conv2_w"], params["conv2_b"]))
    x = x.reshape(x.shape[0], -1)
    return x @ params["fc1_w"].T + params["fc1_b"]


if __name__ == "__main__":
    key = jax.random.PRNGKey(0)
    kx, kp = jax.random.split(key)
    params = init_params(kp)
    prep = prepare_params(params)
    fwd = jax.jit(cnn_forward)

    # fc1 expects 16*7*7 features => MNIST-like 28x28 single-channel input.
    x_small = jax.random.normal(kx, (2, 1, 28, 28), jnp.float32)
    logits = fwd(x_small, prep)
    jax.block_until_ready(logits)
    ref = reference_forward(x_small, params)
    assert logits.shape == (2, 10)
    assert jnp.allclose(logits, ref, atol=2e-3, rtol=2e-3), (
        float(jnp.max(jnp.abs(logits - ref))))

    # Also exercise the multi-tile path (nt = 2 grid steps, tb = 8).
    x_big = jax.random.normal(kx, (16, 1, 28, 28), jnp.float32)
    logits_big = fwd(x_big, prep)
    jax.block_until_ready(logits_big)
    ref_big = reference_forward(x_big, params)
    assert jnp.allclose(logits_big, ref_big, atol=2e-3, rtol=2e-3), (
        float(jnp.max(jnp.abs(logits_big - ref_big))))

    print("KERNEL_OK")
</pallas_src>

<mosaic_0001>
module attributes {stable_mosaic.version = 11 : i64} {
  func.func @_cnn_fused_kernel(%arg0: i32, %arg1: memref<64x32xf32, #tpu.memory_space<vmem>>, %arg2: memref<96x256xf32, #tpu.memory_space<vmem>>, %arg3: memref<1x128xf32, #tpu.memory_space<vmem>>, %arg4: memref<384x256xf32, #tpu.memory_space<vmem>>, %arg5: memref<1x128xf32, #tpu.memory_space<vmem>>, %arg6: memref<896x128xf32, #tpu.memory_space<vmem>>, %arg7: memref<1x128xf32, #tpu.memory_space<vmem>>, %arg8: memref<2x128xf32, #tpu.memory_space<vmem>>, %arg9: memref<40x128xf32, #tpu.memory_space<vmem>>, %arg10: memref<14x128xf32, #tpu.memory_space<vmem>>) attributes {dimension_semantics = [#tpu.dimension_semantics<parallel>], iteration_bounds = array<i64: 1>, scalar_prefetch = 0 : i64, scratch_operands = 2 : i64, tpu.core_type = #tpu.core_type<tc>, window_params = [{transform_indices = @transform_0, window_bounds = array<i64: 64, 32>}, {pipeline_mode = #tpu.pipeline_mode<synchronous>, transform_indices = @transform_1, window_bounds = array<i64: 96, 256>}, {pipeline_mode = #tpu.pipeline_mode<synchronous>, transform_indices = @transform_2, window_bounds = array<i64: 1, 128>}, {pipeline_mode = #tpu.pipeline_mode<synchronous>, transform_indices = @transform_3, window_bounds = array<i64: 384, 256>}, {pipeline_mode = #tpu.pipeline_mode<synchronous>, transform_indices = @transform_4, window_bounds = array<i64: 1, 128>}, {pipeline_mode = #tpu.pipeline_mode<synchronous>, transform_indices = @transform_5, window_bounds = array<i64: 896, 128>}, {pipeline_mode = #tpu.pipeline_mode<synchronous>, transform_indices = @transform_6, window_bounds = array<i64: 1, 128>}, {transform_indices = @transform_7, window_bounds = array<i64: 2, 128>}]} {
    %c0 = arith.constant 0 : index
    %c0_0 = arith.constant 0 : index
    %0 = tpu.strided_load %arg1[%c0, %c0_0] {strides = array<i32: 2, 1>} : memref<64x32xf32, #tpu.memory_space<vmem>>, vector<28x32xf32>
    %c1 = arith.constant 1 : index
    %c0_1 = arith.constant 0 : index
    %1 = tpu.strided_load %arg1[%c1, %c0_1] {strides = array<i32: 2, 1>} : memref<64x32xf32, #tpu.memory_space<vmem>>, vector<28x32xf32>
    %c2 = arith.constant 2 : index
    %c0_2 = arith.constant 0 : index
    %2 = tpu.strided_load %arg1[%c2, %c0_2] {strides = array<i32: 2, 1>} : memref<64x32xf32, #tpu.memory_space<vmem>>, vector<28x32xf32>
    %c3 = arith.constant 3 : index
    %c0_3 = arith.constant 0 : index
    %3 = tpu.strided_load %arg1[%c3, %c0_3] {strides = array<i32: 2, 1>} : memref<64x32xf32, #tpu.memory_space<vmem>>, vector<28x32xf32>
    %4 = tpu.iota {dimensions = array<i32: 0>} : vector<28x1xi32>
    %c14_i32 = arith.constant 14 : i32
    %c0_i32 = arith.constant 0 : i32
    %5 = arith.cmpi eq, %c14_i32, %c0_i32 : i32
    %c1_i32 = arith.constant 1 : i32
    %6 = arith.select %5, %c1_i32, %c14_i32 : i32
    %7 = vector.broadcast %6 : i32 to vector<28x1xi32>
    %8 = arith.remsi %4, %7 : vector<28x1xi32>
    %c0_i32_4 = arith.constant 0 : i32
    %9 = vector.broadcast %c0_i32_4 : i32 to vector<28x1xi32>
    %10 = arith.cmpi ne, %8, %9 : vector<28x1xi32>
    %c0_i32_5 = arith.constant 0 : i32
    %11 = vector.broadcast %c0_i32_5 : i32 to vector<28x1xi32>
    %12 = arith.cmpi slt, %8, %11 : vector<28x1xi32>
    %c0_i32_6 = arith.constant 0 : i32
    %13 = arith.cmpi slt, %6, %c0_i32_6 : i32
    %14 = vector.broadcast %13 : i1 to vector<28x1xi1>
    %15 = vector.broadcast %14 : vector<28x1xi1> to vector<28x1xi1>
    %16 = arith.xori %12, %15 : vector<28x1xi1>
    %17 = arith.andi %16, %10 : vector<28x1xi1>
    %18 = vector.broadcast %6 : i32 to vector<28x1xi32>
    %19 = arith.addi %8, %18 : vector<28x1xi32>
    %20 = arith.select %17, %19, %8 : vector<28x1xi1>, vector<28x1xi32>
    %c0_i32_7 = arith.constant 0 : i32
    %21 = vector.broadcast %c0_i32_7 : i32 to vector<28x1xi32>
    %22 = arith.cmpi eq, %20, %21 : vector<28x1xi32>
    %cst = arith.constant 0.000000e+00 : f32
    %23 = vector.shape_cast %22 : vector<28x1xi1> to vector<28x1xi1>
    %24 = vector.broadcast %23 : vector<28x1xi1> to vector<28x32xi1>
    %25 = vector.broadcast %cst : f32 to vector<28x32xf32>
    %26 = arith.select %24, %25, %0 : vector<28x32xi1>, vector<28x32xf32>
    %c13_i32 = arith.constant 13 : i32
    %27 = vector.broadcast %c13_i32 : i32 to vector<28x1xi32>
    %28 = arith.cmpi eq, %20, %27 : vector<28x1xi32>
    %cst_8 = arith.constant 0.000000e+00 : f32
    %29 = vector.shape_cast %28 : vector<28x1xi1> to vector<28x1xi1>
    %30 = vector.broadcast %29 : vector<28x1xi1> to vector<28x32xi1>
    %31 = vector.broadcast %cst_8 : f32 to vector<28x32xf32>
    %32 = arith.select %30, %31, %3 : vector<28x32xi1>, vector<28x32xf32>
    %c0_9 = arith.constant 0 : index
    %c0_10 = arith.constant 0 : index
    %33 = vector.load %arg2[%c0_9, %c0_10] : memref<96x256xf32, #tpu.memory_space<vmem>>, vector<32x256xf32>
    %c32 = arith.constant 32 : index
    %c0_11 = arith.constant 0 : index
    %34 = vector.load %arg2[%c32, %c0_11] : memref<96x256xf32, #tpu.memory_space<vmem>>, vector<32x256xf32>
    %c64 = arith.constant 64 : index
    %c0_12 = arith.constant 0 : index
    %35 = vector.load %arg2[%c64, %c0_12] : memref<96x256xf32, #tpu.memory_space<vmem>>, vector<32x256xf32>
    %cst_13 = arith.constant dense<0.000000e+00> : vector<28x256xf32>
    %36 = tpu.matmul %26, %33, %cst_13 {dimension_numbers = #tpu.dot_dimension_numbers<[1], [0], [0], [1], [0, 0, 1, 1], [], []>} : vector<28x32xf32>, vector<32x256xf32>, vector<28x256xf32> -> vector<28x256xf32>
    %cst_14 = arith.constant dense<0.000000e+00> : vector<28x256xf32>
    %37 = tpu.matmul %1, %34, %cst_14 {dimension_numbers = #tpu.dot_dimension_numbers<[1], [0], [0], [1], [0, 0, 1, 1], [], []>} : vector<28x32xf32>, vector<32x256xf32>, vector<28x256xf32> -> vector<28x256xf32>
    %38 = arith.addf %36, %37 : vector<28x256xf32>
    %cst_15 = arith.constant dense<0.000000e+00> : vector<28x256xf32>
    %39 = tpu.matmul %2, %35, %cst_15 {dimension_numbers = #tpu.dot_dimension_numbers<[1], [0], [0], [1], [0, 0, 1, 1], [], []>} : vector<28x32xf32>, vector<32x256xf32>, vector<28x256xf32> -> vector<28x256xf32>
    %40 = arith.addf %38, %39 : vector<28x256xf32>
    %cst_16 = arith.constant dense<0.000000e+00> : vector<28x256xf32>
    %41 = tpu.matmul %1, %33, %cst_16 {dimension_numbers = #tpu.dot_dimension_numbers<[1], [0], [0], [1], [0, 0, 1, 1], [], []>} : vector<28x32xf32>, vector<32x256xf32>, vector<28x256xf32> -> vector<28x256xf32>
    %cst_17 = arith.constant dense<0.000000e+00> : vector<28x256xf32>
    %42 = tpu.matmul %2, %34, %cst_17 {dimension_numbers = #tpu.dot_dimension_numbers<[1], [0], [0], [1], [0, 0, 1, 1], [], []>} : vector<28x32xf32>, vector<32x256xf32>, vector<28x256xf32> -> vector<28x256xf32>
    %43 = arith.addf %41, %42 : vector<28x256xf32>
    %cst_18 = arith.constant dense<0.000000e+00> : vector<28x256xf32>
    %44 = tpu.matmul %32, %35, %cst_18 {dimension_numbers = #tpu.dot_dimension_numbers<[1], [0], [0], [1], [0, 0, 1, 1], [], []>} : vector<28x32xf32>, vector<32x256xf32>, vector<28x256xf32> -> vector<28x256xf32>
    %45 = arith.addf %43, %44 : vector<28x256xf32>
    %46 = arith.maximumf %40, %45 : vector<28x256xf32>
    %47 = vector.extract_strided_slice %46 {offsets = [0, 0], sizes = [28, 128], strides = [1, 1]} : vector<28x256xf32> to vector<28x128xf32>
    %48 = vector.extract_strided_slice %46 {offsets = [0, 128], sizes = [28, 128], strides = [1, 1]} : vector<28x256xf32> to vector<28x128xf32>
    %49 = arith.maximumf %47, %48 : vector<28x128xf32>
    %c0_19 = arith.constant 0 : index
    %c0_20 = arith.constant 0 : index
    %50 = vector.load %arg3[%c0_19, %c0_20] : memref<1x128xf32, #tpu.memory_space<vmem>>, vector<1x128xf32>
    %51 = vector.broadcast %50 : vector<1x128xf32> to vector<28x128xf32>
    %52 = arith.addf %49, %51 : vector<28x128xf32>
    %cst_21 = arith.constant 0.000000e+00 : f32
    %53 = vector.broadcast %cst_21 : f32 to vector<28x128xf32>
    %54 = arith.maximumf %52, %53 : vector<28x128xf32>
    %c8 = arith.constant 8 : index
    %c0_22 = arith.constant 0 : index
    %55 = vector.load %arg9[%c8, %c0_22] : memref<40x128xf32, #tpu.memory_space<vmem>>, vector<28x128xf32>
    tpu.vector_store %arg9[%c8, %c0_22], %54 {strides = array<i32>} : memref<40x128xf32, #tpu.memory_space<vmem>>, vector<28x128xf32>,
    %c7 = arith.constant 7 : index
    %c0_23 = arith.constant 0 : index
    %56 = tpu.strided_load %arg9[%c7, %c0_23] {strides = array<i32: 2, 1>} : memref<40x128xf32, #tpu.memory_space<vmem>>, vector<14x128xf32>
    %c8_24 = arith.constant 8 : index
    %c0_25 = arith.constant 0 : index
    %57 = tpu.strided_load %arg9[%c8_24, %c0_25] {strides = array<i32: 2, 1>} : memref<40x128xf32, #tpu.memory_space<vmem>>, vector<14x128xf32>
    %c9 = arith.constant 9 : index
    %c0_26 = arith.constant 0 : index
    %58 = tpu.strided_load %arg9[%c9, %c0_26] {strides = array<i32: 2, 1>} : memref<40x128xf32, #tpu.memory_space<vmem>>, vector<14x128xf32>
    %c10 = arith.constant 10 : index
    %c0_27 = arith.constant 0 : index
    %59 = tpu.strided_load %arg9[%c10, %c0_27] {strides = array<i32: 2, 1>} : memref<40x128xf32, #tpu.memory_space<vmem>>, vector<14x128xf32>
    %60 = tpu.iota {dimensions = array<i32: 0>} : vector<14x1xi32>
    %c7_i32 = arith.constant 7 : i32
    %c0_i32_28 = arith.constant 0 : i32
    %61 = arith.cmpi eq, %c7_i32, %c0_i32_28 : i32
    %c1_i32_29 = arith.constant 1 : i32
    %62 = arith.select %61, %c1_i32_29, %c7_i32 : i32
    %63 = vector.broadcast %62 : i32 to vector<14x1xi32>
    %64 = arith.remsi %60, %63 : vector<14x1xi32>
    %c0_i32_30 = arith.constant 0 : i32
    %65 = vector.broadcast %c0_i32_30 : i32 to vector<14x1xi32>
    %66 = arith.cmpi ne, %64, %65 : vector<14x1xi32>
    %c0_i32_31 = arith.constant 0 : i32
    %67 = vector.broadcast %c0_i32_31 : i32 to vector<14x1xi32>
    %68 = arith.cmpi slt, %64, %67 : vector<14x1xi32>
    %c0_i32_32 = arith.constant 0 : i32
    %69 = arith.cmpi slt, %62, %c0_i32_32 : i32
    %70 = vector.broadcast %69 : i1 to vector<14x1xi1>
    %71 = vector.broadcast %70 : vector<14x1xi1> to vector<14x1xi1>
    %72 = arith.xori %68, %71 : vector<14x1xi1>
    %73 = arith.andi %72, %66 : vector<14x1xi1>
    %74 = vector.broadcast %62 : i32 to vector<14x1xi32>
    %75 = arith.addi %64, %74 : vector<14x1xi32>
    %76 = arith.select %73, %75, %64 : vector<14x1xi1>, vector<14x1xi32>
    %c0_i32_33 = arith.constant 0 : i32
    %77 = vector.broadcast %c0_i32_33 : i32 to vector<14x1xi32>
    %78 = arith.cmpi eq, %76, %77 : vector<14x1xi32>
    %cst_34 = arith.constant 0.000000e+00 : f32
    %79 = vector.shape_cast %78 : vector<14x1xi1> to vector<14x1xi1>
    %80 = vector.broadcast %79 : vector<14x1xi1> to vector<14x128xi1>
    %81 = vector.broadcast %cst_34 : f32 to vector<14x128xf32>
    %82 = arith.select %80, %81, %56 : vector<14x128xi1>, vector<14x128xf32>
    %c6_i32 = arith.constant 6 : i32
    %83 = vector.broadcast %c6_i32 : i32 to vector<14x1xi32>
    %84 = arith.cmpi eq, %76, %83 : vector<14x1xi32>
    %cst_35 = arith.constant 0.000000e+00 : f32
    %85 = vector.shape_cast %84 : vector<14x1xi1> to vector<14x1xi1>
    %86 = vector.broadcast %85 : vector<14x1xi1> to vector<14x128xi1>
    %87 = vector.broadcast %cst_35 : f32 to vector<14x128xf32>
    %88 = arith.select %86, %87, %59 : vector<14x128xi1>, vector<14x128xf32>
    %89 = tpu.concatenate %82, %57, %58 in 1 : vector<14x128xf32>, vector<14x128xf32>, vector<14x128xf32> -> vector<14x384xf32>
    %90 = tpu.concatenate %57, %58, %88 in 1 : vector<14x128xf32>, vector<14x128xf32>, vector<14x128xf32> -> vector<14x384xf32>
    %c0_36 = arith.constant 0 : index
    %c0_37 = arith.constant 0 : index
    %91 = vector.load %arg4[%c0_36, %c0_37] : memref<384x256xf32, #tpu.memory_space<vmem>>, vector<384x256xf32>
    %cst_38 = arith.constant dense<0.000000e+00> : vector<14x256xf32>
    %92 = tpu.matmul %89, %91, %cst_38 {dimension_numbers = #tpu.dot_dimension_numbers<[1], [0], [0], [1], [0, 0, 1, 1], [], []>} : vector<14x384xf32>, vector<384x256xf32>, vector<14x256xf32> -> vector<14x256xf32>
    %cst_39 = arith.constant dense<0.000000e+00> : vector<14x256xf32>
    %93 = tpu.matmul %90, %91, %cst_39 {dimension_numbers = #tpu.dot_dimension_numbers<[1], [0], [0], [1], [0, 0, 1, 1], [], []>} : vector<14x384xf32>, vector<384x256xf32>, vector<14x256xf32> -> vector<14x256xf32>
    %94 = arith.maximumf %92, %93 : vector<14x256xf32>
    %95 = vector.extract_strided_slice %94 {offsets = [0, 0], sizes = [14, 128], strides = [1, 1]} : vector<14x256xf32> to vector<14x128xf32>
    %96 = vector.extract_strided_slice %94 {offsets = [0, 128], sizes = [14, 128], strides = [1, 1]} : vector<14x256xf32> to vector<14x128xf32>
    %97 = arith.maximumf %95, %96 : vector<14x128xf32>
    %c0_40 = arith.constant 0 : index
    %c0_41 = arith.constant 0 : index
    %98 = vector.load %arg5[%c0_40, %c0_41] : memref<1x128xf32, #tpu.memory_space<vmem>>, vector<1x128xf32>
    %99 = vector.broadcast %98 : vector<1x128xf32> to vector<14x128xf32>
    %100 = arith.addf %97, %99 : vector<14x128xf32>
    %cst_42 = arith.constant 0.000000e+00 : f32
    %101 = vector.broadcast %cst_42 : f32 to vector<14x128xf32>
    %102 = arith.maximumf %100, %101 : vector<14x128xf32>
    %c0_43 = arith.constant 0 : index
    %c0_44 = arith.constant 0 : index
    %103 = vector.load %arg10[%c0_43, %c0_44] : memref<14x128xf32, #tpu.memory_space<vmem>>, vector<14x128xf32>
    tpu.vector_store %arg10[%c0_43, %c0_44], %102 {strides = array<i32>} : memref<14x128xf32, #tpu.memory_space<vmem>>, vector<14x128xf32>,
    %c0_45 = arith.constant 0 : index
    %c0_46 = arith.constant 0 : index
    %104 = tpu.strided_load %arg10[%c0_45, %c0_46] {strides = array<i32: 7, 1>} : memref<14x128xf32, #tpu.memory_space<vmem>>, vector<2x128xf32>
    %c1_47 = arith.constant 1 : index
    %c0_48 = arith.constant 0 : index
    %105 = tpu.strided_load %arg10[%c1_47, %c0_48] {strides = array<i32: 7, 1>} : memref<14x128xf32, #tpu.memory_space<vmem>>, vector<2x128xf32>
    %c2_49 = arith.constant 2 : index
    %c0_50 = arith.constant 0 : index
    %106 = tpu.strided_load %arg10[%c2_49, %c0_50] {strides = array<i32: 7, 1>} : memref<14x128xf32, #tpu.memory_space<vmem>>, vector<2x128xf32>
    %c3_51 = arith.constant 3 : index
    %c0_52 = arith.constant 0 : index
    %107 = tpu.strided_load %arg10[%c3_51, %c0_52] {strides = array<i32: 7, 1>} : memref<14x128xf32, #tpu.memory_space<vmem>>, vector<2x128xf32>
    %c4 = arith.constant 4 : index
    %c0_53 = arith.constant 0 : index
    %108 = tpu.strided_load %arg10[%c4, %c0_53] {strides = array<i32: 7, 1>} : memref<14x128xf32, #tpu.memory_space<vmem>>, vector<2x128xf32>
    %c5 = arith.constant 5 : index
    %c0_54 = arith.constant 0 : index
    %109 = tpu.strided_load %arg10[%c5, %c0_54] {strides = array<i32: 7, 1>} : memref<14x128xf32, #tpu.memory_space<vmem>>, vector<2x128xf32>
    %c6 = arith.constant 6 : index
    %c0_55 = arith.constant 0 : index
    %110 = tpu.strided_load %arg10[%c6, %c0_55] {strides = array<i32: 7, 1>} : memref<14x128xf32, #tpu.memory_space<vmem>>, vector<2x128xf32>
    %111 = tpu.concatenate %104, %105, %106, %107, %108, %109, %110 in 1 : vector<2x128xf32>, vector<2x128xf32>, vector<2x128xf32>, vector<2x128xf32>, vector<2x128xf32>, vector<2x128xf32>, vector<2x128xf32> -> vector<2x896xf32>
    %c0_56 = arith.constant 0 : index
    %c0_57 = arith.constant 0 : index
    %112 = vector.load %arg6[%c0_56, %c0_57] : memref<896x128xf32, #tpu.memory_space<vmem>>, vector<896x128xf32>
    %cst_58 = arith.constant dense<0.000000e+00> : vector<2x128xf32>
    %113 = tpu.matmul %111, %112, %cst_58 {dimension_numbers = #tpu.dot_dimension_numbers<[1], [0], [0], [1], [0, 0, 1, 1], [], []>} : vector<2x896xf32>, vector<896x128xf32>, vector<2x128xf32> -> vector<2x128xf32>
    %c0_59 = arith.constant 0 : index
    %c0_60 = arith.constant 0 : index
    %114 = vector.load %arg7[%c0_59, %c0_60] : memref<1x128xf32, #tpu.memory_space<vmem>>, vector<1x128xf32>
    %115 = vector.broadcast %114 : vector<1x128xf32> to vector<2x128xf32>
    %116 = arith.addf %113, %115 : vector<2x128xf32>
    %c0_61 = arith.constant 0 : index
    %c0_62 = arith.constant 0 : index
    %117 = vector.load %arg8[%c0_61, %c0_62] : memref<2x128xf32, #tpu.memory_space<vmem>>, vector<2x128xf32>
    tpu.vector_store %arg8[%c0_61, %c0_62], %116 {strides = array<i32>} : memref<2x128xf32, #tpu.memory_space<vmem>>, vector<2x128xf32>,
    return
  }
  func.func @transform_0(%arg0: i32) -> (i32, i32) {
    %c0_i32 = arith.constant 0 : i32
    %c0_i32_0 = arith.constant 0 : i32
    return %arg0, %c0_i32 : i32, i32
  }
  func.func @transform_1(%arg0: i32) -> (i32, i32) {
    %c0_i32 = arith.constant 0 : i32
    %c0_i32_0 = arith.constant 0 : i32
    %c0_i32_1 = arith.constant 0 : i32
    return %c0_i32, %c0_i32_0 : i32, i32
  }
  func.func @transform_2(%arg0: i32) -> (i32, i32) {
    %c0_i32 = arith.constant 0 : i32
    %c0_i32_0 = arith.constant 0 : i32
    %c0_i32_1 = arith.constant 0 : i32
    return %c0_i32, %c0_i32_0 : i32, i32
  }
  func.func @transform_3(%arg0: i32) -> (i32, i32) {
    %c0_i32 = arith.constant 0 : i32
    %c0_i32_0 = arith.constant 0 : i32
    %c0_i32_1 = arith.constant 0 : i32
    return %c0_i32, %c0_i32_0 : i32, i32
  }
  func.func @transform_4(%arg0: i32) -> (i32, i32) {
    %c0_i32 = arith.constant 0 : i32
    %c0_i32_0 = arith.constant 0 : i32
    %c0_i32_1 = arith.constant 0 : i32
    return %c0_i32, %c0_i32_0 : i32, i32
  }
  func.func @transform_5(%arg0: i32) -> (i32, i32) {
    %c0_i32 = arith.constant 0 : i32
    %c0_i32_0 = arith.constant 0 : i32
    %c0_i32_1 = arith.constant 0 : i32
    return %c0_i32, %c0_i32_0 : i32, i32
  }
  func.func @transform_6(%arg0: i32) -> (i32, i32) {
    %c0_i32 = arith.constant 0 : i32
    %c0_i32_0 = arith.constant 0 : i32
    %c0_i32_1 = arith.constant 0 : i32
    return %c0_i32, %c0_i32_0 : i32, i32
  }
  func.func @transform_7(%arg0: i32) -> (i32, i32) {
    %c0_i32 = arith.constant 0 : i32
    %c0_i32_0 = arith.constant 0 : i32
    return %arg0, %c0_i32 : i32, i32
  }
}

</mosaic_0001>

<llo_original>
// kernel: cnn_forward.1
$region0: #{cnn_forward.1}
  #allocation0 [shape = 'u32[]', space=smem, size = 0x4, offset = 0x4, fixed_abs, tag = 'smem constant byte address 0x4 - core index']
  #allocation1 [shape = 'u32[144,128]{1,0:T(1,128)}', space=vmem, size = 0x12000, scoped, tag = 'internal scratch']
  #allocation2 [shape = 'f32[40,128]{1,0:T(8,128)}', space=vmem, size = 0x5000, scoped, tag = 'scratch operand']
  #allocation3 [shape = 'f32[14,128]{1,0:T(8,128)}', space=vmem, size = 0x2000, scoped, tag = 'scratch operand']
  %s0 = inlined_call_operand.vmem [shape: f32[64,32], index: 0, kind: input, shape index: {}]
  %s1 = inlined_call_operand.hbm [shape: f32[96,256], index: 1, kind: input, shape index: {}]
  %s2 = inlined_call_operand.vmem [shape: f32[1,128], index: 2, kind: input, shape index: {}]
  %s3 = inlined_call_operand.hbm [shape: f32[384,256], index: 3, kind: input, shape index: {}]
  %s4 = inlined_call_operand.vmem [shape: f32[1,128], index: 4, kind: input, shape index: {}]
  %s5 = inlined_call_operand.hbm [shape: f32[896,128], index: 5, kind: input, shape index: {}]
  %s6 = inlined_call_operand.vmem [shape: f32[1,128], index: 6, kind: input, shape index: {}]
  %s7 = inlined_call_operand.hbm [shape: f32[2,128], index: 7, kind: output, shape index: {}]
  %s8 = sld [smem:[#allocation0]]
  $region50: #{cnn_forward.1} parent=0
    _
  %s10 = ssub.s32 1, %s8
  %s11 = scalar_select 0, %s10, %s8
  $region1: #{cnn_forward.1} parent=0
    #allocation4 [shape = 'u8[98304]{0}', space=vmem, size = 0x18000, scoped, tag = 'input window, operand 1, single buffered']
    #allocation5 [shape = 's32[1]{0}', space=sflag, size = 0x4, scoped, tag = 'scoped memory for cnn_forward.1']
    #allocation6 [shape = 's32[1]{0}', space=sflag, size = 0x4, scoped, tag = 'scoped memory for cnn_forward.1']
    #allocation7 [shape = 'u8[393216]{0}', space=vmem, size = 0x60000, scoped, tag = 'input window, operand 3, single buffered']
    #allocation8 [shape = 's32[1]{0}', space=sflag, size = 0x4, scoped, tag = 'scoped memory for cnn_forward.1']
    #allocation9 [shape = 'u8[458752]{0}', space=vmem, size = 0x70000, scoped, tag = 'input window, operand 5, single buffered']
    #allocation10 [shape = 'u8[1024]{0}', space=vmem, size = 0x400, scoped, tag = 'output window, operand 0, single buffered']
    %12 = vsyncpa [#allocation5], 0
    %13 = vsyncpa [#allocation8], 0
    %14 = vsyncpa [#allocation6], 0
    // Predicated region
    $region2: #{cnn_forward.1} parent=1 // pred_check
      _
    $region3: #{cnn_forward.1} parent=1 // pred_check_branch
      %16 = sbr.rel (0) target = $region5
    $region4: #{cnn_forward.1} parent=1 // pred_region
      _
    $region5: #{cnn_forward.1} parent=1 // pred_fallthru
      _
    // Predicated region
    $region6: #{cnn_forward.1} parent=1 // pred_check
      _
    $region7: #{cnn_forward.1} parent=1 // pred_check_branch
      %18 = sbr.rel (0) target = $region9
    $region8: #{cnn_forward.1} parent=1 // pred_region
      %s20 = ssub.s32 3072, 3072
      %21 = vsyncadd [#allocation5], %s20
      %s22 = sshll.u32 [#allocation4], 4
      %s23 = int_to_ptr.vmem [resolvable:$true] %s22
      %28 = dma.hbm_to_vmem [thread:$0]  %s1, 3072, %s23, [#allocation5], 256, 256, 16
    $region9: #{cnn_forward.1} parent=1 // pred_fallthru
      _
    // Predicated region
    $region10: #{cnn_forward.1} parent=1 // pred_check
      _
    $region11: #{cnn_forward.1} parent=1 // pred_check_branch
      %30 = sbr.rel (0) target = $region13
    $region12: #{cnn_forward.1} parent=1 // pred_region
      _
    $region13: #{cnn_forward.1} parent=1 // pred_fallthru
      _
    // Predicated region
    $region14: #{cnn_forward.1} parent=1 // pred_check
      _
    $region15: #{cnn_forward.1} parent=1 // pred_check_branch
      %32 = sbr.rel (0) target = $region17
    $region16: #{cnn_forward.1} parent=1 // pred_region
      %s34 = ssub.s32 12288, 12288
      %35 = vsyncadd [#allocation8], %s34
      %s36 = sshll.u32 [#allocation7], 4
      %s37 = int_to_ptr.vmem [resolvable:$true] %s36
      %42 = dma.hbm_to_vmem [thread:$0]  %s3, 12288, %s37, [#allocation8], 256, 256, 16
    $region17: #{cnn_forward.1} parent=1 // pred_fallthru
      _
    // Predicated region
    $region18: #{cnn_forward.1} parent=1 // pred_check
      _
    $region19: #{cnn_forward.1} parent=1 // pred_check_branch
      %44 = sbr.rel (0) target = $region21
    $region20: #{cnn_forward.1} parent=1 // pred_region
      _
    $region21: #{cnn_forward.1} parent=1 // pred_fallthru
      _
    // Predicated region
    $region22: #{cnn_forward.1} parent=1 // pred_check
      _
    $region23: #{cnn_forward.1} parent=1 // pred_check_branch
      %46 = sbr.rel (0) target = $region25
    $region24: #{cnn_forward.1} parent=1 // pred_region
      %s48 = ssub.s32 14336, 14336
      %49 = vsyncadd [#allocation8], %s48
      %s50 = sshll.u32 [#allocation9], 4
      %s51 = int_to_ptr.vmem [resolvable:$true] %s50
      %56 = dma.hbm_to_vmem [thread:$0]  %s5, 14336, %s51, [#allocation8], 128, 128, 8
    $region25: #{cnn_forward.1} parent=1 // pred_fallthru
      _
    // Predicated region
    $region26: #{cnn_forward.1} parent=1 // pred_check
      _
    $region27: #{cnn_forward.1} parent=1 // pred_check_branch
      %58 = sbr.rel (0) target = $region29
    $region28: #{cnn_forward.1} parent=1 // pred_region
      _
    $region29: #{cnn_forward.1} parent=1 // pred_fallthru
      _
    // Predicated region
    $region30: #{cnn_forward.1} parent=1 // pred_check
      _
    $region31: #{cnn_forward.1} parent=1 // pred_check_branch
      %60 = sbr.rel (0) target = $region33
    $region32: #{cnn_forward.1} parent=1 // pred_region
      %61 = dma.done [#allocation5], 3072
    $region33: #{cnn_forward.1} parent=1 // pred_fallthru
      _
    // Predicated region
    $region34: #{cnn_forward.1} parent=1 // pred_check
      _
    $region35: #{cnn_forward.1} parent=1 // pred_check_branch
      %63 = sbr.rel (0) target = $region37
    $region36: #{cnn_forward.1} parent=1 // pred_region
      %64 = dma.done [#allocation8], 12288
    $region37: #{cnn_forward.1} parent=1 // pred_fallthru
      _
    // Predicated region
    $region38: #{cnn_forward.1} parent=1 // pred_check
      _
    $region39: #{cnn_forward.1} parent=1 // pred_check_branch
      %66 = sbr.rel (0) target = $region41
    $region40: #{cnn_forward.1} parent=1 // pred_region
      %67 = dma.done [#allocation8], 14336
    $region41: #{cnn_forward.1} parent=1 // pred_fallthru
      _
    %v68 = vld [vmem:[%s0] ss:$2 sm:$0xff]
    %s69 = scalar_lea.vmem %s0, 16
    %v70 = vld [vmem:[%s69] ss:$2 sm:$0xff]
    %s71 = scalar_lea.vmem %s0, 32
    %v72 = vld [vmem:[%s71] ss:$2 sm:$0xff]
    %s73 = scalar_lea.vmem %s0, 48
    %v74 = vld [vmem:[%s73] ss:$2 sm:$0xf]
    %s75 = scalar_lea.vmem %s0, 1
    %v76 = vld [vmem:[%s75] ss:$2 sm:$0xff]
    %s77 = scalar_lea.vmem %s0, 17
    %v78 = vld [vmem:[%s77] ss:$2 sm:$0xff]
    %s79 = scalar_lea.vmem %s0, 33
    %v80 = vld [vmem:[%s79] ss:$2 sm:$0xff]
    %s81 = scalar_lea.vmem %s0, 49
    %v82 = vld [vmem:[%s81] ss:$2 sm:$0xf]
    %s83 = scalar_lea.vmem %s0, 2
    %v84 = vld [vmem:[%s83] ss:$2 sm:$0xff]
    %s85 = scalar_lea.vmem %s0, 18
    %v86 = vld [vmem:[%s85] ss:$2 sm:$0xff]
    %s87 = scalar_lea.vmem %s0, 34
    %v88 = vld [vmem:[%s87] ss:$2 sm:$0xff]
    %s89 = scalar_lea.vmem %s0, 50
    %v90 = vld [vmem:[%s89] ss:$2 sm:$0xf]
    %s91 = scalar_lea.vmem %s0, 3
    %v92 = vld [vmem:[%s91] ss:$2 sm:$0xff]
    %s93 = scalar_lea.vmem %s0, 19
    %v94 = vld [vmem:[%s93] ss:$2 sm:$0xff]
    %s95 = scalar_lea.vmem %s0, 35
    %v96 = vld [vmem:[%s95] ss:$2 sm:$0xff]
    %s97 = scalar_lea.vmem %s0, 51
    %v98 = vld [vmem:[%s97] ss:$2 sm:$0xf]
    %v99 = vlaneseq
    %v100 = vshrl.u32 %v99, 7
    %v101 = vadd.s32 %v100, 8
    %v102 = vadd.s32 %v100, 16
    %v103 = vadd.s32 %v100, 24
    %vm104 = vcmp.lt.s32.totalorder %v100, 0
    %v105 = vsub.s32 0, %v100
    %v106 = vsel %vm104, %v105, %v100
    %v107 = vmul.u32.u64.compose %v106, 2454267026
    %v108 = vextract.low.u32 %v107
    %v109 = vextract.high.u32 %v107
    %vm110 = vc.u32 %v108, 2454267026
    %v111 = vsel %vm110, 1, 0
    %v112 = vadd.s32 %v109, %v111
    %v113 = vshrl.u32 %v112, 3
    %v114 = vmul.u32 %v113, 14
    %v115 = vsub.s32 %v106, %v114
    %v116 = vsub.s32 0, %v115
    %v117 = vsel %vm104, %v116, %v115
    %vm118 = vcmp.lt.s32.totalorder %v101, 0
    %v119 = vsub.s32 0, %v101
    %v120 = vsel %vm118, %v119, %v101
    %v121 = vmul.u32.u64.compose %v120, 2454267026
    %v122 = vextract.low.u32 %v121
    %v123 = vextract.high.u32 %v121
    %vm124 = vc.u32 %v122, 2454267026
    %v125 = vsel %vm124, 1, 0
    %v126 = vadd.s32 %v123, %v125
    %v127 = vshrl.u32 %v126, 3
    %v128 = vmul.u32 %v127, 14
    %v129 = vsub.s32 %v120, %v128
    %v130 = vsub.s32 0, %v129
    %v131 = vsel %vm118, %v130, %v129
    %vm132 = vcmp.lt.s32.totalorder %v102, 0
    %v133 = vsub.s32 0, %v102
    %v134 = vsel %vm132, %v133, %v102
    %v135 = vmul.u32.u64.compose %v134, 2454267026
    %v136 = vextract.low.u32 %v135
    %v137 = vextract.high.u32 %v135
    %vm138 = vc.u32 %v136, 2454267026
    %v139 = vsel %vm138, 1, 0
    %v140 = vadd.s32 %v137, %v139
    %v141 = vshrl.u32 %v140, 3
    %v142 = vmul.u32 %v141, 14
    %v143 = vsub.s32 %v134, %v142
    %v144 = vsub.s32 0, %v143
    %v145 = vsel %vm132, %v144, %v143
    %vm146 = vcmp.lt.s32.totalorder %v103, 0
    %v147 = vsub.s32 0, %v103
    %v148 = vsel %vm146, %v147, %v103
    %v149 = vmul.u32.u64.compose %v148, 2454267026
    %v150 = vextract.low.u32 %v149
    %v151 = vextract.high.u32 %v149
    %vm152 = vc.u32 %v150, 2454267026
    %v153 = vsel %vm152, 1, 0
    %v154 = vadd.s32 %v151, %v153
    %v155 = vshrl.u32 %v154, 3
    %v156 = vmul.u32 %v155, 14
    %v157 = vsub.s32 %v148, %v156
    %v158 = vsub.s32 0, %v157
    %v159 = vsel %vm146, %v158, %v157
    %vm160 = vcmp.ne.s32.totalorder %v117, 0
    %vm161 = vcmp.ne.s32.totalorder %v131, 0
    %vm162 = vcmp.ne.s32.totalorder %v145, 0
    %vm163 = vcmp.ne.s32.totalorder %v159, 0
    %vm164 = vcmp.lt.s32.totalorder %v117, 0
    %vm165 = vcmp.lt.s32.totalorder %v131, 0
    %vm166 = vcmp.lt.s32.totalorder %v145, 0
    %vm167 = vcmp.lt.s32.totalorder %v159, 0
    %vm168 = vmand %vm164, %vm160
    %vm169 = vmand %vm165, %vm161
    %vm170 = vmand %vm166, %vm162
    %vm171 = vmand %vm167, %vm163
    %v172 = vadd.s32 %v117, 14
    %v173 = vadd.s32 %v131, 14
    %v174 = vadd.s32 %v145, 14
    %v175 = vadd.s32 %v159, 14
    %v176 = vsel %vm168, %v172, %v117
    %v177 = vsel %vm169, %v173, %v131
    %v178 = vsel %vm170, %v174, %v145
    %v179 = vsel %vm171, %v175, %v159
    %vm180 = vcmp.eq.s32.totalorder %v176, 0
    %vm181 = vcmp.eq.s32.totalorder %v177, 0
    %vm182 = vcmp.eq.s32.totalorder %v178, 0
    %vm183 = vcmp.eq.s32.totalorder %v179, 0
    %v184 = vsel %vm180, 1, 0
    %v185 = vsel %vm181, 1, 0
    %v186 = vsel %vm182, 1, 0
    %v187 = vsel %vm183, 1, 0
    %vm188 = vcmp.eq.s32.totalorder %v184, 1
    %vm189 = vcmp.eq.s32.totalorder %v185, 1
    %vm190 = vcmp.eq.s32.totalorder %v186, 1
    %vm191 = vcmp.eq.s32.totalorder %v187, 1
    %v192 = vsel %vm188, 0.0, %v68
    %v193 = vsel %vm189, 0.0, %v70
    %v194 = vsel %vm190, 0.0, %v72
    %v195 = vsel %vm191, 0.0, %v74
    %vm196 = vcmp.eq.s32.totalorder %v176, 13
    %vm197 = vcmp.eq.s32.totalorder %v177, 13
    %vm198 = vcmp.eq.s32.totalorder %v178, 13
    %vm199 = vcmp.eq.s32.totalorder %v179, 13
    %v200 = vsel %vm196, 1, 0
    %v201 = vsel %vm197, 1, 0
    %v202 = vsel %vm198, 1, 0
    %v203 = vsel %vm199, 1, 0
    %vm204 = vcmp.eq.s32.totalorder %v200, 1
    %vm205 = vcmp.eq.s32.totalorder %v201, 1
    %vm206 = vcmp.eq.s32.totalorder %v202, 1
    %vm207 = vcmp.eq.s32.totalorder %v203, 1
    %v208 = vsel %vm204, 0.0, %v92
    %v209 = vsel %vm205, 0.0, %v94
    %v210 = vsel %vm206, 0.0, %v96
    %v211 = vsel %vm207, 0.0, %v98
    %v212 = vld [vmem:[#allocation4] sm:$0xff]
    %v213 = vld [vmem:[#allocation4 + $0x8] sm:$0xff]
    %v214 = vld [vmem:[#allocation4 + $0x10] sm:$0xff]
    %v215 = vld [vmem:[#allocation4 + $0x18] sm:$0xff]
    %v216 = vld [vmem:[#allocation4 + $0x20] sm:$0xff]
    %v217 = vld [vmem:[#allocation4 + $0x28] sm:$0xff]
    %v218 = vld [vmem:[#allocation4 + $0x30] sm:$0xff]
    %v219 = vld [vmem:[#allocation4 + $0x38] sm:$0xff]
    %v220 = vld [vmem:[#allocation4 + $0x40] sm:$0xff]
    %v221 = vld [vmem:[#allocation4 + $0x48] sm:$0xff]
    %v222 = vld [vmem:[#allocation4 + $0x50] sm:$0xff]
    %v223 = vld [vmem:[#allocation4 + $0x58] sm:$0xff]
    %v224 = vld [vmem:[#allocation4 + $0x60] sm:$0xff]
    %v225 = vld [vmem:[#allocation4 + $0x68] sm:$0xff]
    %v226 = vld [vmem:[#allocation4 + $0x70] sm:$0xff]
    %v227 = vld [vmem:[#allocation4 + $0x78] sm:$0xff]
    %v228 = vld [vmem:[#allocation4 + $0x80] sm:$0xff]
    %v229 = vld [vmem:[#allocation4 + $0x88] sm:$0xff]
    %v230 = vld [vmem:[#allocation4 + $0x90] sm:$0xff]
    %v231 = vld [vmem:[#allocation4 + $0x98] sm:$0xff]
    %v232 = vld [vmem:[#allocation4 + $0xa0] sm:$0xff]
    %v233 = vld [vmem:[#allocation4 + $0xa8] sm:$0xff]
    %v234 = vld [vmem:[#allocation4 + $0xb0] sm:$0xff]
    %v235 = vld [vmem:[#allocation4 + $0xb8] sm:$0xff]
    %vm236 = vcmask 261120
    %v238 = vsel %vm236, %v76, 0
    %v241 = vsel %vm236, %v78, 0
    %v244 = vsel %vm236, %v80, 0
    %v247 = vsel %vm236, %v82, 0
    %249 = vmatprep.subr.mxu0 0.0
    %250 = vmatpush1.msra.mxu0 0.0
    %251 = vmatprep.subr.mxu0 0.0
    %252 = vmatpush1.msra.mxu0 0.0
    %253 = vmatprep.subr.mxu0 0.0
    %254 = vmatpush1.msra.mxu0 0.0
    %255 = vmatprep.subr.mxu0 0.0
    %256 = vmatpush1.msra.mxu0 0.0
    %257 = vmatprep.subr.mxu0 0.0
    %258 = vmatpush1.msra.mxu0 0.0
    %259 = vmatprep.subr.mxu0 0.0
    %260 = vmatpush1.msra.mxu0 0.0
    %261 = vmatprep.subr.mxu0 0.0
    %262 = vmatpush1.msra.mxu0 0.0
    %263 = vmatprep.subr.mxu0 0.0
    %264 = vmatpush1.msra.mxu0 0.0
    %265 = vmatprep.subr.mxu0 0.0
    %266 = vmatpush1.msra.mxu0 0.0
    %267 = vmatprep.subr.mxu0 0.0
    %268 = vmatpush1.msra.mxu0 0.0
    %269 = vmatprep.subr.mxu0 0.0
    %270 = vmatpush1.msra.mxu0 0.0
    %271 = vmatprep.subr.mxu0 0.0
    %272 = vmatpush1.msra.mxu0 0.0
    %273 = vmatprep.subr.mxu0 %v227
    %274 = vmatpush1.msra.mxu0 %v226
    %275 = vmatprep.subr.mxu0 %v225
    %276 = vmatpush1.msra.mxu0 %v224
    %277 = vmatprep.subr.mxu0 %v223
    %278 = vmatpush1.msra.mxu0 %v222
    %279 = vmatprep.subr.mxu0 %v221
    %280 = vmatpush1.msra.mxu0 %v220
    %281 = vmatprep.subr.mxu0 0.0
    %282 = vmatpush2.msra.mxu0 0.0
    %283 = vmatprep.subr.mxu0 0.0
    %284 = vmatpush2.msra.mxu0 0.0
    %285 = vmatprep.subr.mxu0 0.0
    %286 = vmatpush2.msra.mxu0 0.0
    %287 = vmatprep.subr.mxu0 0.0
    %288 = vmatpush2.msra.mxu0 0.0
    %289 = vmatprep.subr.mxu0 0.0
    %290 = vmatpush2.msra.mxu0 0.0
    %291 = vmatprep.subr.mxu0 0.0
    %292 = vmatpush2.msra.mxu0 0.0
    %293 = vmatprep.subr.mxu0 0.0
    %294 = vmatpush2.msra.mxu0 0.0
    %295 = vmatprep.subr.mxu0 0.0
    %296 = vmatpush2.msra.mxu0 0.0
    %297 = vmatprep.subr.mxu0 0.0
    %298 = vmatpush2.msra.mxu0 0.0
    %299 = vmatprep.subr.mxu0 0.0
    %300 = vmatpush2.msra.mxu0 0.0
    %301 = vmatprep.subr.mxu0 0.0
    %302 = vmatpush2.msra.mxu0 0.0
    %303 = vmatprep.subr.mxu0 0.0
    %304 = vmatpush2.msra.mxu0 0.0
    %305 = vmatprep.subr.mxu0 0.0
    %306 = vmatpush2.msra.mxu0 0.0
    %307 = vmatprep.subr.mxu0 0.0
    %308 = vmatpush2.msra.mxu0 0.0
    %309 = vmatprep.subr.mxu0 0.0
    %310 = vmatpush2.msra.mxu0 0.0
    %311 = vmatprep.subr.mxu0 0.0
    %312 = vmatpush2.msra.mxu0 0.0
    %313 = vmatprep.mubr.f32.mxu0 0.0
    %314 = vmatmul.mubr.f32.gmra.mxu0 %v238
    %v315 = vpop.f32.mrf.mxu0
    %v316 = vadd.f32 0.0, %v315
    %v317 = vpop.f32.mrf.mxu0
    %v318 = vadd.f32 0.0, %v317
    %319 = vmatprep.mubr.f32.mxu0 0.0
    %320 = vmatmul.mubr.f32.gmra.mxu0 %v241
    %v321 = vpop.f32.mrf.mxu0
    %v322 = vadd.f32 0.0, %v321
    %v323 = vpop.f32.mrf.mxu0
    %v324 = vadd.f32 0.0, %v323
    %325 = vmatprep.mubr.f32.mxu0 0.0
    %326 = vmatmul.mubr.f32.gmra.mxu0 %v244
    %v327 = vpop.f32.mrf.mxu0
    %v328 = vadd.f32 0.0, %v327
    %v329 = vpop.f32.mrf.mxu0
    %v330 = vadd.f32 0.0, %v329
    %331 = vmatprep.mubr.f32.mxu0 0.0
    %332 = vmatmul.mubr.f32.gmra.mxu0 %v247
    %v333 = vpop.f32.mrf.mxu0
    %v334 = vadd.f32 0.0, %v333
    %v335 = vpop.f32.mrf.mxu0
    %v336 = vadd.f32 0.0, %v335
    %337 = vdwg.mxu0
    %v339 = vsel %vm236, %v192, 0
    %v342 = vsel %vm236, %v193, 0
    %v345 = vsel %vm236, %v194, 0
    %v348 = vsel %vm236, %v195, 0
    %350 = vmatprep.subr.mxu0 0.0
    %351 = vmatpush1.msra.mxu0 0.0
    %352 = vmatprep.subr.mxu0 0.0
    %353 = vmatpush1.msra.mxu0 0.0
    %354 = vmatprep.subr.mxu0 0.0
    %355 = vmatpush1.msra.mxu0 0.0
    %356 = vmatprep.subr.mxu0 0.0
    %357 = vmatpush1.msra.mxu0 0.0
    %358 = vmatprep.subr.mxu0 0.0
    %359 = vmatpush1.msra.mxu0 0.0
    %360 = vmatprep.subr.mxu0 0.0
    %361 = vmatpush1.msra.mxu0 0.0
    %362 = vmatprep.subr.mxu0 0.0
    %363 = vmatpush1.msra.mxu0 0.0
    %364 = vmatprep.subr.mxu0 0.0
    %365 = vmatpush1.msra.mxu0 0.0
    %366 = vmatprep.subr.mxu0 0.0
    %367 = vmatpush1.msra.mxu0 0.0
    %368 = vmatprep.subr.mxu0 0.0
    %369 = vmatpush1.msra.mxu0 0.0
    %370 = vmatprep.subr.mxu0 0.0
    %371 = vmatpush1.msra.mxu0 0.0
    %372 = vmatprep.subr.mxu0 0.0
    %373 = vmatpush1.msra.mxu0 0.0
    %374 = vmatprep.subr.mxu0 %v219
    %375 = vmatpush1.msra.mxu0 %v218
    %376 = vmatprep.subr.mxu0 %v217
    %377 = vmatpush1.msra.mxu0 %v216
    %378 = vmatprep.subr.mxu0 %v215
    %379 = vmatpush1.msra.mxu0 %v214
    %380 = vmatprep.subr.mxu0 %v213
    %381 = vmatpush1.msra.mxu0 %v212
    %382 = vmatprep.subr.mxu0 0.0
    %383 = vmatpush2.msra.mxu0 0.0
    %384 = vmatprep.subr.mxu0 0.0
    %385 = vmatpush2.msra.mxu0 0.0
    %386 = vmatprep.subr.mxu0 0.0
    %387 = vmatpush2.msra.mxu0 0.0
    %388 = vmatprep.subr.mxu0 0.0
    %389 = vmatpush2.msra.mxu0 0.0
    %390 = vmatprep.subr.mxu0 0.0
    %391 = vmatpush2.msra.mxu0 0.0
    %392 = vmatprep.subr.mxu0 0.0
    %393 = vmatpush2.msra.mxu0 0.0
    %394 = vmatprep.subr.mxu0 0.0
    %395 = vmatpush2.msra.mxu0 0.0
    %396 = vmatprep.subr.mxu0 0.0
    %397 = vmatpush2.msra.mxu0 0.0
    %398 = vmatprep.subr.mxu0 0.0
    %399 = vmatpush2.msra.mxu0 0.0
    %400 = vmatprep.subr.mxu0 0.0
    %401 = vmatpush2.msra.mxu0 0.0
    %402 = vmatprep.subr.mxu0 0.0
    %403 = vmatpush2.msra.mxu0 0.0
    %404 = vmatprep.subr.mxu0 0.0
    %405 = vmatpush2.msra.mxu0 0.0
    %406 = vmatprep.subr.mxu0 0.0
    %407 = vmatpush2.msra.mxu0 0.0
    %408 = vmatprep.subr.mxu0 0.0
    %409 = vmatpush2.msra.mxu0 0.0
    %410 = vmatprep.subr.mxu0 0.0
    %411 = vmatpush2.msra.mxu0 0.0
    %412 = vmatprep.subr.mxu0 0.0
    %413 = vmatpush2.msra.mxu0 0.0
    %414 = vmatprep.mubr.f32.mxu0 0.0
    %415 = vmatmul.mubr.f32.gmra.mxu0 %v339
    %v416 = vpop.f32.mrf.mxu0
    %v417 = vadd.f32 %v316, %v416
    %v418 = vpop.f32.mrf.mxu0
    %v419 = vadd.f32 %v318, %v418
    %420 = vmatprep.mubr.f32.mxu0 0.0
    %421 = vmatmul.mubr.f32.gmra.mxu0 %v342
    %v422 = vpop.f32.mrf.mxu0
    %v423 = vadd.f32 %v322, %v422
    %v424 = vpop.f32.mrf.mxu0
    %v425 = vadd.f32 %v324, %v424
    %426 = vmatprep.mubr.f32.mxu0 0.0
    %427 = vmatmul.mubr.f32.gmra.mxu0 %v345
    %v428 = vpop.f32.mrf.mxu0
    %v429 = vadd.f32 %v328, %v428
    %v430 = vpop.f32.mrf.mxu0
    %v431 = vadd.f32 %v330, %v430
    %432 = vmatprep.mubr.f32.mxu0 0.0
    %433 = vmatmul.mubr.f32.gmra.mxu0 %v348
    %v434 = vpop.f32.mrf.mxu0
    %v435 = vadd.f32 %v334, %v434
    %v436 = vpop.f32.mrf.mxu0
    %v437 = vadd.f32 %v336, %v436
    %438 = vdwg.mxu0
    %v440 = vsel %vm236, %v84, 0
    %v443 = vsel %vm236, %v86, 0
    %v446 = vsel %vm236, %v88, 0
    %v449 = vsel %vm236, %v90, 0
    %451 = vmatprep.subr.mxu0 0.0
    %452 = vmatpush1.msra.mxu0 0.0
    %453 = vmatprep.subr.mxu0 0.0
    %454 = vmatpush1.msra.mxu0 0.0
    %455 = vmatprep.subr.mxu0 0.0
    %456 = vmatpush1.msra.mxu0 0.0
    %457 = vmatprep.subr.mxu0 0.0
    %458 = vmatpush1.msra.mxu0 0.0
    %459 = vmatprep.subr.mxu0 0.0
    %460 = vmatpush1.msra.mxu0 0.0
    %461 = vmatprep.subr.mxu0 0.0
    %462 = vmatpush1.msra.mxu0 0.0
    %463 = vmatprep.subr.mxu0 0.0
    %464 = vmatpush1.msra.mxu0 0.0
    %465 = vmatprep.subr.mxu0 0.0
    %466 = vmatpush1.msra.mxu0 0.0
    %467 = vmatprep.subr.mxu0 0.0
    %468 = vmatpush1.msra.mxu0 0.0
    %469 = vmatprep.subr.mxu0 0.0
    %470 = vmatpush1.msra.mxu0 0.0
    %471 = vmatprep.subr.mxu0 0.0
    %472 = vmatpush1.msra.mxu0 0.0
    %473 = vmatprep.subr.mxu0 0.0
    %474 = vmatpush1.msra.mxu0 0.0
    %475 = vmatprep.subr.mxu0 %v235
    %476 = vmatpush1.msra.mxu0 %v234
    %477 = vmatprep.subr.mxu0 %v233
    %478 = vmatpush1.msra.mxu0 %v232
    %479 = vmatprep.subr.mxu0 %v231
    %480 = vmatpush1.msra.mxu0 %v230
    %481 = vmatprep.subr.mxu0 %v229
    %482 = vmatpush1.msra.mxu0 %v228
    %483 = vmatprep.subr.mxu0 0.0
    %484 = vmatpush2.msra.mxu0 0.0
    %485 = vmatprep.subr.mxu0 0.0
    %486 = vmatpush2.msra.mxu0 0.0
    %487 = vmatprep.subr.mxu0 0.0
    %488 = vmatpush2.msra.mxu0 0.0
    %489 = vmatprep.subr.mxu0 0.0
    %490 = vmatpush2.msra.mxu0 0.0
    %491 = vmatprep.subr.mxu0 0.0
    %492 = vmatpush2.msra.mxu0 0.0
    %493 = vmatprep.subr.mxu0 0.0
    %494 = vmatpush2.msra.mxu0 0.0
    %495 = vmatprep.subr.mxu0 0.0
    %496 = vmatpush2.msra.mxu0 0.0
    %497 = vmatprep.subr.mxu0 0.0
    %498 = vmatpush2.msra.mxu0 0.0
    %499 = vmatprep.subr.mxu0 0.0
    %500 = vmatpush2.msra.mxu0 0.0
    %501 = vmatprep.subr.mxu0 0.0
    %502 = vmatpush2.msra.mxu0 0.0
    %503 = vmatprep.subr.mxu0 0.0
    %504 = vmatpush2.msra.mxu0 0.0
    %505 = vmatprep.subr.mxu0 0.0
    %506 = vmatpush2.msra.mxu0 0.0
    %507 = vmatprep.subr.mxu0 0.0
    %508 = vmatpush2.msra.mxu0 0.0
    %509 = vmatprep.subr.mxu0 0.0
    %510 = vmatpush2.msra.mxu0 0.0
    %511 = vmatprep.subr.mxu0 0.0
    %512 = vmatpush2.msra.mxu0 0.0
    %513 = vmatprep.subr.mxu0 0.0
    %514 = vmatpush2.msra.mxu0 0.0
    %515 = vmatprep.mubr.f32.mxu0 0.0
    %516 = vmatmul.mubr.f32.gmra.mxu0 %v440
    %v517 = vpop.f32.mrf.mxu0
    %v518 = vadd.f32 0.0, %v517
    %v519 = vpop.f32.mrf.mxu0
    %v520 = vadd.f32 0.0, %v519
    %521 = vmatprep.mubr.f32.mxu0 0.0
    %522 = vmatmul.mubr.f32.gmra.mxu0 %v443
    %v523 = vpop.f32.mrf.mxu0
    %v524 = vadd.f32 0.0, %v523
    %v525 = vpop.f32.mrf.mxu0
    %v526 = vadd.f32 0.0, %v525
    %527 = vmatprep.mubr.f32.mxu0 0.0
    %528 = vmatmul.mubr.f32.gmra.mxu0 %v446
    %v529 = vpop.f32.mrf.mxu0
    %v530 = vadd.f32 0.0, %v529
    %v531 = vpop.f32.mrf.mxu0
    %v532 = vadd.f32 0.0, %v531
    %533 = vmatprep.mubr.f32.mxu0 0.0
    %534 = vmatmul.mubr.f32.gmra.mxu0 %v449
    %v535 = vpop.f32.mrf.mxu0
    %v536 = vadd.f32 0.0, %v535
    %v537 = vpop.f32.mrf.mxu0
    %v538 = vadd.f32 0.0, %v537
    %539 = vdwg.mxu0
    %v540 = vadd.f32 %v417, %v518
    %v541 = vadd.f32 %v419, %v520
    %v542 = vadd.f32 %v423, %v524
    %v543 = vadd.f32 %v425, %v526
    %v544 = vadd.f32 %v429, %v530
    %v545 = vadd.f32 %v431, %v532
    %v546 = vadd.f32 %v435, %v536
    %v547 = vadd.f32 %v437, %v538
    %548 = vmatprep.subr.mxu0 0.0
    %549 = vmatpush1.msra.mxu0 0.0
    %550 = vmatprep.subr.mxu0 0.0
    %551 = vmatpush1.msra.mxu0 0.0
    %552 = vmatprep.subr.mxu0 0.0
    %553 = vmatpush1.msra.mxu0 0.0
    %554 = vmatprep.subr.mxu0 0.0
    %555 = vmatpush1.msra.mxu0 0.0
    %556 = vmatprep.subr.mxu0 0.0
    %557 = vmatpush1.msra.mxu0 0.0
    %558 = vmatprep.subr.mxu0 0.0
    %559 = vmatpush1.msra.mxu0 0.0
    %560 = vmatprep.subr.mxu0 0.0
    %561 = vmatpush1.msra.mxu0 0.0
    %562 = vmatprep.subr.mxu0 0.0
    %563 = vmatpush1.msra.mxu0 0.0
    %564 = vmatprep.subr.mxu0 0.0
    %565 = vmatpush1.msra.mxu0 0.0
    %566 = vmatprep.subr.mxu0 0.0
    %567 = vmatpush1.msra.mxu0 0.0
    %568 = vmatprep.subr.mxu0 0.0
    %569 = vmatpush1.msra.mxu0 0.0
    %570 = vmatprep.subr.mxu0 0.0
    %571 = vmatpush1.msra.mxu0 0.0
    %572 = vmatprep.subr.mxu0 %v227
    %573 = vmatpush1.msra.mxu0 %v226
    %574 = vmatprep.subr.mxu0 %v225
    %575 = vmatpush1.msra.mxu0 %v224
    %576 = vmatprep.subr.mxu0 %v223
    %577 = vmatpush1.msra.mxu0 %v222
    %578 = vmatprep.subr.mxu0 %v221
    %579 = vmatpush1.msra.mxu0 %v220
    %580 = vmatprep.subr.mxu0 0.0
    %581 = vmatpush2.msra.mxu0 0.0
    %582 = vmatprep.subr.mxu0 0.0
    %583 = vmatpush2.msra.mxu0 0.0
    %584 = vmatprep.subr.mxu0 0.0
    %585 = vmatpush2.msra.mxu0 0.0
    %586 = vmatprep.subr.mxu0 0.0
    %587 = vmatpush2.msra.mxu0 0.0
    %588 = vmatprep.subr.mxu0 0.0
    %589 = vmatpush2.msra.mxu0 0.0
    %590 = vmatprep.subr.mxu0 0.0
    %591 = vmatpush2.msra.mxu0 0.0
    %592 = vmatprep.subr.mxu0 0.0
    %593 = vmatpush2.msra.mxu0 0.0
    %594 = vmatprep.subr.mxu0 0.0
    %595 = vmatpush2.msra.mxu0 0.0
    %596 = vmatprep.subr.mxu0 0.0
    %597 = vmatpush2.msra.mxu0 0.0
    %598 = vmatprep.subr.mxu0 0.0
    %599 = vmatpush2.msra.mxu0 0.0
    %600 = vmatprep.subr.mxu0 0.0
    %601 = vmatpush2.msra.mxu0 0.0
    %602 = vmatprep.subr.mxu0 0.0
    %603 = vmatpush2.msra.mxu0 0.0
    %604 = vmatprep.subr.mxu0 0.0
    %605 = vmatpush2.msra.mxu0 0.0
    %606 = vmatprep.subr.mxu0 0.0
    %607 = vmatpush2.msra.mxu0 0.0
    %608 = vmatprep.subr.mxu0 0.0
    %609 = vmatpush2.msra.mxu0 0.0
    %610 = vmatprep.subr.mxu0 0.0
    %611 = vmatpush2.msra.mxu0 0.0
    %612 = vmatprep.mubr.f32.mxu0 0.0
    %613 = vmatmul.mubr.f32.gmra.mxu0 %v440
    %v614 = vpop.f32.mrf.mxu0
    %v615 = vadd.f32 0.0, %v614
    %v616 = vpop.f32.mrf.mxu0
    %v617 = vadd.f32 0.0, %v616
    %618 = vmatprep.mubr.f32.mxu0 0.0
    %619 = vmatmul.mubr.f32.gmra.mxu0 %v443
    %v620 = vpop.f32.mrf.mxu0
    %v621 = vadd.f32 0.0, %v620
    %v622 = vpop.f32.mrf.mxu0
    %v623 = vadd.f32 0.0, %v622
    %624 = vmatprep.mubr.f32.mxu0 0.0
    %625 = vmatmul.mubr.f32.gmra.mxu0 %v446
    %v626 = vpop.f32.mrf.mxu0
    %v627 = vadd.f32 0.0, %v626
    %v628 = vpop.f32.mrf.mxu0
    %v629 = vadd.f32 0.0, %v628
    %630 = vmatprep.mubr.f32.mxu0 0.0
    %631 = vmatmul.mubr.f32.gmra.mxu0 %v449
    %v632 = vpop.f32.mrf.mxu0
    %v633 = vadd.f32 0.0, %v632
    %v634 = vpop.f32.mrf.mxu0
    %v635 = vadd.f32 0.0, %v634
    %636 = vdwg.mxu0
    %637 = vmatprep.subr.mxu0 0.0
    %638 = vmatpush1.msra.mxu0 0.0
    %639 = vmatprep.subr.mxu0 0.0
    %640 = vmatpush1.msra.mxu0 0.0
    %641 = vmatprep.subr.mxu0 0.0
    %642 = vmatpush1.msra.mxu0 0.0
    %643 = vmatprep.subr.mxu0 0.0
    %644 = vmatpush1.msra.mxu0 0.0
    %645 = vmatprep.subr.mxu0 0.0
    %646 = vmatpush1.msra.mxu0 0.0
    %647 = vmatprep.subr.mxu0 0.0
    %648 = vmatpush1.msra.mxu0 0.0
    %649 = vmatprep.subr.mxu0 0.0
    %650 = vmatpush1.msra.mxu0 0.0
    %651 = vmatprep.subr.mxu0 0.0
    %652 = vmatpush1.msra.mxu0 0.0
    %653 = vmatprep.subr.mxu0 0.0
    %654 = vmatpush1.msra.mxu0 0.0
    %655 = vmatprep.subr.mxu0 0.0
    %656 = vmatpush1.msra.mxu0 0.0
    %657 = vmatprep.subr.mxu0 0.0
    %658 = vmatpush1.msra.mxu0 0.0
    %659 = vmatprep.subr.mxu0 0.0
    %660 = vmatpush1.msra.mxu0 0.0
    %661 = vmatprep.subr.mxu0 %v219
    %662 = vmatpush1.msra.mxu0 %v218
    %663 = vmatprep.subr.mxu0 %v217
    %664 = vmatpush1.msra.mxu0 %v216
    %665 = vmatprep.subr.mxu0 %v215
    %666 = vmatpush1.msra.mxu0 %v214
    %667 = vmatprep.subr.mxu0 %v213
    %668 = vmatpush1.msra.mxu0 %v212
    %669 = vmatprep.subr.mxu0 0.0
    %670 = vmatpush2.msra.mxu0 0.0
    %671 = vmatprep.subr.mxu0 0.0
    %672 = vmatpush2.msra.mxu0 0.0
    %673 = vmatprep.subr.mxu0 0.0
    %674 = vmatpush2.msra.mxu0 0.0
    %675 = vmatprep.subr.mxu0 0.0
    %676 = vmatpush2.msra.mxu0 0.0
    %677 = vmatprep.subr.mxu0 0.0
    %678 = vmatpush2.msra.mxu0 0.0
    %679 = vmatprep.subr.mxu0 0.0
    %680 = vmatpush2.msra.mxu0 0.0
    %681 = vmatprep.subr.mxu0 0.0
    %682 = vmatpush2.msra.mxu0 0.0
    %683 = vmatprep.subr.mxu0 0.0
    %684 = vmatpush2.msra.mxu0 0.0
    %685 = vmatprep.subr.mxu0 0.0
    %686 = vmatpush2.msra.mxu0 0.0
    %687 = vmatprep.subr.mxu0 0.0
    %688 = vmatpush2.msra.mxu0 0.0
    %689 = vmatprep.subr.mxu0 0.0
    %690 = vmatpush2.msra.mxu0 0.0
    %691 = vmatprep.subr.mxu0 0.0
    %692 = vmatpush2.msra.mxu0 0.0
    %693 = vmatprep.subr.mxu0 0.0
    %694 = vmatpush2.msra.mxu0 0.0
    %695 = vmatprep.subr.mxu0 0.0
    %696 = vmatpush2.msra.mxu0 0.0
    %697 = vmatprep.subr.mxu0 0.0
    %698 = vmatpush2.msra.mxu0 0.0
    %699 = vmatprep.subr.mxu0 0.0
    %700 = vmatpush2.msra.mxu0 0.0
    %701 = vmatprep.mubr.f32.mxu0 0.0
    %702 = vmatmul.mubr.f32.gmra.mxu0 %v238
    %v703 = vpop.f32.mrf.mxu0
    %v704 = vadd.f32 %v615, %v703
    %v705 = vpop.f32.mrf.mxu0
    %v706 = vadd.f32 %v617, %v705
    %707 = vmatprep.mubr.f32.mxu0 0.0
    %708 = vmatmul.mubr.f32.gmra.mxu0 %v241
    %v709 = vpop.f32.mrf.mxu0
    %v710 = vadd.f32 %v621, %v709
    %v711 = vpop.f32.mrf.mxu0
    %v712 = vadd.f32 %v623, %v711
    %713 = vmatprep.mubr.f32.mxu0 0.0
    %714 = vmatmul.mubr.f32.gmra.mxu0 %v244
    %v715 = vpop.f32.mrf.mxu0
    %v716 = vadd.f32 %v627, %v715
    %v717 = vpop.f32.mrf.mxu0
    %v718 = vadd.f32 %v629, %v717
    %719 = vmatprep.mubr.f32.mxu0 0.0
    %720 = vmatmul.mubr.f32.gmra.mxu0 %v247
    %v721 = vpop.f32.mrf.mxu0
    %v722 = vadd.f32 %v633, %v721
    %v723 = vpop.f32.mrf.mxu0
    %v724 = vadd.f32 %v635, %v723
    %725 = vdwg.mxu0
    %v727 = vsel %vm236, %v208, 0
    %v730 = vsel %vm236, %v209, 0
    %v733 = vsel %vm236, %v210, 0
    %v736 = vsel %vm236, %v211, 0
    %738 = vmatprep.subr.mxu0 0.0
    %739 = vmatpush1.msra.mxu0 0.0
    %740 = vmatprep.subr.mxu0 0.0
    %741 = vmatpush1.msra.mxu0 0.0
    %742 = vmatprep.subr.mxu0 0.0
    %743 = vmatpush1.msra.mxu0 0.0
    %744 = vmatprep.subr.mxu0 0.0
    %745 = vmatpush1.msra.mxu0 0.0
    %746 = vmatprep.subr.mxu0 0.0
    %747 = vmatpush1.msra.mxu0 0.0
    %748 = vmatprep.subr.mxu0 0.0
    %749 = vmatpush1.msra.mxu0 0.0
    %750 = vmatprep.subr.mxu0 0.0
    %751 = vmatpush1.msra.mxu0 0.0
    %752 = vmatprep.subr.mxu0 0.0
    %753 = vmatpush1.msra.mxu0 0.0
    %754 = vmatprep.subr.mxu0 0.0
    %755 = vmatpush1.msra.mxu0 0.0
    %756 = vmatprep.subr.mxu0 0.0
    %757 = vmatpush1.msra.mxu0 0.0
    %758 = vmatprep.subr.mxu0 0.0
    %759 = vmatpush1.msra.mxu0 0.0
    %760 = vmatprep.subr.mxu0 0.0
    %761 = vmatpush1.msra.mxu0 0.0
    %762 = vmatprep.subr.mxu0 %v235
    %763 = vmatpush1.msra.mxu0 %v234
    %764 = vmatprep.subr.mxu0 %v233
    %765 = vmatpush1.msra.mxu0 %v232
    %766 = vmatprep.subr.mxu0 %v231
    %767 = vmatpush1.msra.mxu0 %v230
    %768 = vmatprep.subr.mxu0 %v229
    %769 = vmatpush1.msra.mxu0 %v228
    %770 = vmatprep.subr.mxu0 0.0
    %771 = vmatpush2.msra.mxu0 0.0
    %772 = vmatprep.subr.mxu0 0.0
    %773 = vmatpush2.msra.mxu0 0.0
    %774 = vmatprep.subr.mxu0 0.0
    %775 = vmatpush2.msra.mxu0 0.0
    %776 = vmatprep.subr.mxu0 0.0
    %777 = vmatpush2.msra.mxu0 0.0
    %778 = vmatprep.subr.mxu0 0.0
    %779 = vmatpush2.msra.mxu0 0.0
    %780 = vmatprep.subr.mxu0 0.0
    %781 = vmatpush2.msra.mxu0 0.0
    %782 = vmatprep.subr.mxu0 0.0
    %783 = vmatpush2.msra.mxu0 0.0
    %784 = vmatprep.subr.mxu0 0.0
    %785 = vmatpush2.msra.mxu0 0.0
    %786 = vmatprep.subr.mxu0 0.0
    %787 = vmatpush2.msra.mxu0 0.0
    %788 = vmatprep.subr.mxu0 0.0
    %789 = vmatpush2.msra.mxu0 0.0
    %790 = vmatprep.subr.mxu0 0.0
    %791 = vmatpush2.msra.mxu0 0.0
    %792 = vmatprep.subr.mxu0 0.0
    %793 = vmatpush2.msra.mxu0 0.0
    %794 = vmatprep.subr.mxu0 0.0
    %795 = vmatpush2.msra.mxu0 0.0
    %796 = vmatprep.subr.mxu0 0.0
    %797 = vmatpush2.msra.mxu0 0.0
    %798 = vmatprep.subr.mxu0 0.0
    %799 = vmatpush2.msra.mxu0 0.0
    %800 = vmatprep.subr.mxu0 0.0
    %801 = vmatpush2.msra.mxu0 0.0
    %802 = vmatprep.mubr.f32.mxu0 0.0
    %803 = vmatmul.mubr.f32.gmra.mxu0 %v727
    %v804 = vpop.f32.mrf.mxu0
    %v805 = vadd.f32 0.0, %v804
    %v806 = vpop.f32.mrf.mxu0
    %v807 = vadd.f32 0.0, %v806
    %808 = vmatprep.mubr.f32.mxu0 0.0
    %809 = vmatmul.mubr.f32.gmra.mxu0 %v730
    %v810 = vpop.f32.mrf.mxu0
    %v811 = vadd.f32 0.0, %v810
    %v812 = vpop.f32.mrf.mxu0
    %v813 = vadd.f32 0.0, %v812
    %814 = vmatprep.mubr.f32.mxu0 0.0
    %815 = vmatmul.mubr.f32.gmra.mxu0 %v733
    %v816 = vpop.f32.mrf.mxu0
    %v817 = vadd.f32 0.0, %v816
    %v818 = vpop.f32.mrf.mxu0
    %v819 = vadd.f32 0.0, %v818
    %820 = vmatprep.mubr.f32.mxu0 0.0
    %821 = vmatmul.mubr.f32.gmra.mxu0 %v736
    %v822 = vpop.f32.mrf.mxu0
    %v823 = vadd.f32 0.0, %v822
    %v824 = vpop.f32.mrf.mxu0
    %v825 = vadd.f32 0.0, %v824
    %826 = vdwg.mxu0
    %v827 = vadd.f32 %v704, %v805
    %v828 = vadd.f32 %v706, %v807
    %v829 = vadd.f32 %v710, %v811
    %v830 = vadd.f32 %v712, %v813
    %v831 = vadd.f32 %v716, %v817
    %v832 = vadd.f32 %v718, %v819
    %v833 = vadd.f32 %v722, %v823
    %v834 = vadd.f32 %v724, %v825
    %v835 = vmax.f32 %v540, %v827
    %v836 = vmax.f32 %v541, %v828
    %v837 = vmax.f32 %v542, %v829
    %v838 = vmax.f32 %v543, %v830
    %v839 = vmax.f32 %v544, %v831
    %v840 = vmax.f32 %v545, %v832
    %v841 = vmax.f32 %v546, %v833
    %v842 = vmax.f32 %v547, %v834
    %v843 = vmax.f32 %v835, %v836
    %v844 = vmax.f32 %v837, %v838
    %v845 = vmax.f32 %v839, %v840
    %v846 = vmax.f32 %v841, %v842
    %v847 = vld [vmem:[%s2] sm:$0x1]
    %v849 = vlaneseq
    %v850 = vshrl.u32 %v849, 7
    %v851 = vsub.s32 0, %v850
    %v852 = vrot.slane %v847, %v851
    %v854 = vadd.f32 %v843, %v852
    %v855 = vadd.f32 %v844, %v852
    %v856 = vadd.f32 %v845, %v852
    %v857 = vadd.f32 %v846, %v852
    %v858 = vmax.f32 %v854, 0.0
    %v859 = vmax.f32 %v855, 0.0
    %v860 = vmax.f32 %v856, 0.0
    %v861 = vmax.f32 %v857, 0.0
    %862 = vst [vmem:[#allocation2 + $0x8] sm:$0xff] %v858
    %863 = vst [vmem:[#allocation2 + $0x10] sm:$0xff] %v859
    %864 = vst [vmem:[#allocation2 + $0x18] sm:$0xff] %v860
    %865 = vst [vmem:[#allocation2 + $0x20] sm:$0xf] %v861
    %s866 = scalar_lea.vmem [#allocation2], 7
    %v867 = vld [vmem:[%s866] ss:$2 sm:$0xff]
    %s868 = scalar_lea.vmem [#allocation2], 23
    %v869 = vld [vmem:[%s868] ss:$2 sm:$0x3f]
    %s870 = scalar_lea.vmem [#allocation2], 8
    %v871 = vld [vmem:[%s870] ss:$2 sm:$0xff]
    %s872 = scalar_lea.vmem [#allocation2], 24
    %v873 = vld [vmem:[%s872] ss:$2 sm:$0x3f]
    %s874 = scalar_lea.vmem [#allocation2], 9
    %v875 = vld [vmem:[%s874] ss:$2 sm:$0xff]
    %s876 = scalar_lea.vmem [#allocation2], 25
    %v877 = vld [vmem:[%s876] ss:$2 sm:$0x3f]
    %s878 = scalar_lea.vmem [#allocation2], 10
    %v879 = vld [vmem:[%s878] ss:$2 sm:$0xff]
    %s880 = scalar_lea.vmem [#allocation2], 26
    %v881 = vld [vmem:[%s880] ss:$2 sm:$0x3f]
    %vm882 = vcmp.lt.s32.totalorder %v100, 0
    %v883 = vsub.s32 0, %v100
    %v884 = vsel %vm882, %v883, %v100
    %v885 = vmul.u32.u64.compose %v884, 2454267026
    %v886 = vextract.low.u32 %v885
    %v887 = vextract.high.u32 %v885
    %vm888 = vc.u32 %v886, 2454267026
    %v889 = vsel %vm888, 1, 0
    %v890 = vadd.s32 %v887, %v889
    %v891 = vshrl.u32 %v890, 2
    %v892 = vmul.u32 %v891, 7
    %v893 = vsub.s32 %v884, %v892
    %v894 = vsub.s32 0, %v893
    %v895 = vsel %vm882, %v894, %v893
    %vm896 = vcmp.lt.s32.totalorder %v101, 0
    %v897 = vsub.s32 0, %v101
    %v898 = vsel %vm896, %v897, %v101
    %v899 = vmul.u32.u64.compose %v898, 2454267026
    %v900 = vextract.low.u32 %v899
    %v901 = vextract.high.u32 %v899
    %vm902 = vc.u32 %v900, 2454267026
    %v903 = vsel %vm902, 1, 0
    %v904 = vadd.s32 %v901, %v903
    %v905 = vshrl.u32 %v904, 2
    %v906 = vmul.u32 %v905, 7
    %v907 = vsub.s32 %v898, %v906
    %v908 = vsub.s32 0, %v907
    %v909 = vsel %vm896, %v908, %v907
    %vm910 = vcmp.ne.s32.totalorder %v895, 0
    %vm911 = vcmp.ne.s32.totalorder %v909, 0
    %vm912 = vcmp.lt.s32.totalorder %v895, 0
    %vm913 = vcmp.lt.s32.totalorder %v909, 0
    %vm914 = vmand %vm912, %vm910
    %vm915 = vmand %vm913, %vm911
    %v916 = vadd.s32 %v895, 7
    %v917 = vadd.s32 %v909, 7
    %v918 = vsel %vm914, %v916, %v895
    %v919 = vsel %vm915, %v917, %v909
    %vm920 = vcmp.eq.s32.totalorder %v918, 0
    %vm921 = vcmp.eq.s32.totalorder %v919, 0
    %v922 = vsel %vm920, 1, 0
    %v923 = vsel %vm921, 1, 0
    %vm924 = vcmp.eq.s32.totalorder %v922, 1
    %vm925 = vcmp.eq.s32.totalorder %v923, 1
    %v926 = vsel %vm924, 0.0, %v867
    %v927 = vsel %vm925, 0.0, %v869
    %vm928 = vcmp.eq.s32.totalorder %v918, 6
    %vm929 = vcmp.eq.s32.totalorder %v919, 6
    %v930 = vsel %vm928, 1, 0
    %v931 = vsel %vm929, 1, 0
    %vm932 = vcmp.eq.s32.totalorder %v930, 1
    %vm933 = vcmp.eq.s32.totalorder %v931, 1
    %v934 = vsel %vm932, 0.0, %v879
    %v935 = vsel %vm933, 0.0, %v881
    %v936 = vld [vmem:[#allocation7] sm:$0xff]
    %v937 = vld [vmem:[#allocation7 + $0x8] sm:$0xff]
    %v938 = vld [vmem:[#allocation7 + $0x10] sm:$0xff]
    %v939 = vld [vmem:[#allocation7 + $0x18] sm:$0xff]
    %v940 = vld [vmem:[#allocation7 + $0x20] sm:$0xff]
    %v941 = vld [vmem:[#allocation7 + $0x28] sm:$0xff]
    %v942 = vld [vmem:[#allocation7 + $0x30] sm:$0xff]
    %v943 = vld [vmem:[#allocation7 + $0x38] sm:$0xff]
    %v944 = vld [vmem:[#allocation7 + $0x40] sm:$0xff]
    %v945 = vld [vmem:[#allocation7 + $0x48] sm:$0xff]
    %v946 = vld [vmem:[#allocation7 + $0x50] sm:$0xff]
    %v947 = vld [vmem:[#allocation7 + $0x58] sm:$0xff]
    %v948 = vld [vmem:[#allocation7 + $0x60] sm:$0xff]
    %v949 = vld [vmem:[#allocation7 + $0x68] sm:$0xff]
    %v950 = vld [vmem:[#allocation7 + $0x70] sm:$0xff]
    %v951 = vld [vmem:[#allocation7 + $0x78] sm:$0xff]
    %v952 = vld [vmem:[#allocation7 + $0x80] sm:$0xff]
    %v953 = vld [vmem:[#allocation7 + $0x88] sm:$0xff]
    %v954 = vld [vmem:[#allocation7 + $0x90] sm:$0xff]
    %v955 = vld [vmem:[#allocation7 + $0x98] sm:$0xff]
    %v956 = vld [vmem:[#allocation7 + $0xa0] sm:$0xff]
    %v957 = vld [vmem:[#allocation7 + $0xa8] sm:$0xff]
    %v958 = vld [vmem:[#allocation7 + $0xb0] sm:$0xff]
    %v959 = vld [vmem:[#allocation7 + $0xb8] sm:$0xff]
    %v960 = vld [vmem:[#allocation7 + $0xc0] sm:$0xff]
    %v961 = vld [vmem:[#allocation7 + $0xc8] sm:$0xff]
    %v962 = vld [vmem:[#allocation7 + $0xd0] sm:$0xff]
    %v963 = vld [vmem:[#allocation7 + $0xd8] sm:$0xff]
    %v964 = vld [vmem:[#allocation7 + $0xe0] sm:$0xff]
    %v965 = vld [vmem:[#allocation7 + $0xe8] sm:$0xff]
    %v966 = vld [vmem:[#allocation7 + $0xf0] sm:$0xff]
    %v967 = vld [vmem:[#allocation7 + $0xf8] sm:$0xff]
    %v968 = vld [vmem:[#allocation7 + $0x100] sm:$0xff]
    %v969 = vld [vmem:[#allocation7 + $0x108] sm:$0xff]
    %v970 = vld [vmem:[#allocation7 + $0x110] sm:$0xff]
    %v971 = vld [vmem:[#allocation7 + $0x118] sm:$0xff]
    %v972 = vld [vmem:[#allocation7 + $0x120] sm:$0xff]
    %v973 = vld [vmem:[#allocation7 + $0x128] sm:$0xff]
    %v974 = vld [vmem:[#allocation7 + $0x130] sm:$0xff]
    %v975 = vld [vmem:[#allocation7 + $0x138] sm:$0xff]
    %v976 = vld [vmem:[#allocation7 + $0x140] sm:$0xff]
    %v977 = vld [vmem:[#allocation7 + $0x148] sm:$0xff]
    %v978 = vld [vmem:[#allocation7 + $0x150] sm:$0xff]
    %v979 = vld [vmem:[#allocation7 + $0x158] sm:$0xff]
    %v980 = vld [vmem:[#allocation7 + $0x160] sm:$0xff]
    %v981 = vld [vmem:[#allocation7 + $0x168] sm:$0xff]
    %v982 = vld [vmem:[#allocation7 + $0x170] sm:$0xff]
    %v983 = vld [vmem:[#allocation7 + $0x178] sm:$0xff]
    %v984 = vld [vmem:[#allocation7 + $0x180] sm:$0xff]
    %v985 = vld [vmem:[#allocation7 + $0x188] sm:$0xff]
    %v986 = vld [vmem:[#allocation7 + $0x190] sm:$0xff]
    %v987 = vld [vmem:[#allocation7 + $0x198] sm:$0xff]
    %v988 = vld [vmem:[#allocation7 + $0x1a0] sm:$0xff]
    %v989 = vld [vmem:[#allocation7 + $0x1a8] sm:$0xff]
    %v990 = vld [vmem:[#allocation7 + $0x1b0] sm:$0xff]
    %v991 = vld [vmem:[#allocation7 + $0x1b8] sm:$0xff]
    %v992 = vld [vmem:[#allocation7 + $0x1c0] sm:$0xff]
    %v993 = vld [vmem:[#allocation7 + $0x1c8] sm:$0xff]
    %v994 = vld [vmem:[#allocation7 + $0x1d0] sm:$0xff]
    %v995 = vld [vmem:[#allocation7 + $0x1d8] sm:$0xff]
    %v996 = vld [vmem:[#allocation7 + $0x1e0] sm:$0xff]
    %v997 = vld [vmem:[#allocation7 + $0x1e8] sm:$0xff]
    %v998 = vld [vmem:[#allocation7 + $0x1f0] sm:$0xff]
    %v999 = vld [vmem:[#allocation7 + $0x1f8] sm:$0xff]
    %v1000 = vld [vmem:[#allocation7 + $0x200] sm:$0xff]
    %v1001 = vld [vmem:[#allocation7 + $0x208] sm:$0xff]
    %v1002 = vld [vmem:[#allocation7 + $0x210] sm:$0xff]
    %v1003 = vld [vmem:[#allocation7 + $0x218] sm:$0xff]
    %v1004 = vld [vmem:[#allocation7 + $0x220] sm:$0xff]
    %v1005 = vld [vmem:[#allocation7 + $0x228] sm:$0xff]
    %v1006 = vld [vmem:[#allocation7 + $0x230] sm:$0xff]
    %v1007 = vld [vmem:[#allocation7 + $0x238] sm:$0xff]
    %v1008 = vld [vmem:[#allocation7 + $0x240] sm:$0xff]
    %v1009 = vld [vmem:[#allocation7 + $0x248] sm:$0xff]
    %v1010 = vld [vmem:[#allocation7 + $0x250] sm:$0xff]
    %v1011 = vld [vmem:[#allocation7 + $0x258] sm:$0xff]
    %v1012 = vld [vmem:[#allocation7 + $0x260] sm:$0xff]
    %v1013 = vld [vmem:[#allocation7 + $0x268] sm:$0xff]
    %v1014 = vld [vmem:[#allocation7 + $0x270] sm:$0xff]
    %v1015 = vld [vmem:[#allocation7 + $0x278] sm:$0xff]
    %v1016 = vld [vmem:[#allocation7 + $0x280] sm:$0xff]
    %v1017 = vld [vmem:[#allocation7 + $0x288] sm:$0xff]
    %v1018 = vld [vmem:[#allocation7 + $0x290] sm:$0xff]
    %v1019 = vld [vmem:[#allocation7 + $0x298] sm:$0xff]
    %v1020 = vld [vmem:[#allocation7 + $0x2a0] sm:$0xff]
    %v1021 = vld [vmem:[#allocation7 + $0x2a8] sm:$0xff]
    %v1022 = vld [vmem:[#allocation7 + $0x2b0] sm:$0xff]
    %v1023 = vld [vmem:[#allocation7 + $0x2b8] sm:$0xff]
    %v1024 = vld [vmem:[#allocation7 + $0x2c0] sm:$0xff]
    %v1025 = vld [vmem:[#allocation7 + $0x2c8] sm:$0xff]
    %v1026 = vld [vmem:[#allocation7 + $0x2d0] sm:$0xff]
    %v1027 = vld [vmem:[#allocation7 + $0x2d8] sm:$0xff]
    %v1028 = vld [vmem:[#allocation7 + $0x2e0] sm:$0xff]
    %v1029 = vld [vmem:[#allocation7 + $0x2e8] sm:$0xff]
    %v1030 = vld [vmem:[#allocation7 + $0x2f0] sm:$0xff]
    %v1031 = vld [vmem:[#allocation7 + $0x2f8] sm:$0xff]
    %1032 = vmatprep.subr.mxu0 %v967
    %1033 = vmatpush1.msra.mxu0 %v966
    %1034 = vmatprep.subr.mxu0 %v965
    %1035 = vmatpush1.msra.mxu0 %v964
    %1036 = vmatprep.subr.mxu0 %v963
    %1037 = vmatpush1.msra.mxu0 %v962
    %1038 = vmatprep.subr.mxu0 %v961
    %1039 = vmatpush1.msra.mxu0 %v960
    %1040 = vmatprep.subr.mxu0 %v959
    %1041 = vmatpush1.msra.mxu0 %v958
    %1042 = vmatprep.subr.mxu0 %v957
    %1043 = vmatpush1.msra.mxu0 %v956
    %1044 = vmatprep.subr.mxu0 %v955
    %1045 = vmatpush1.msra.mxu0 %v954
    %1046 = vmatprep.subr.mxu0 %v953
    %1047 = vmatpush1.msra.mxu0 %v952
    %1048 = vmatprep.subr.mxu0 %v951
    %1049 = vmatpush1.msra.mxu0 %v950
    %1050 = vmatprep.subr.mxu0 %v949
    %1051 = vmatpush1.msra.mxu0 %v948
    %1052 = vmatprep.subr.mxu0 %v947
    %1053 = vmatpush1.msra.mxu0 %v946
    %1054 = vmatprep.subr.mxu0 %v945
    %1055 = vmatpush1.msra.mxu0 %v944
    %1056 = vmatprep.subr.mxu0 %v943
    %1057 = vmatpush1.msra.mxu0 %v942
    %1058 = vmatprep.subr.mxu0 %v941
    %1059 = vmatpush1.msra.mxu0 %v940
    %1060 = vmatprep.subr.mxu0 %v939
    %1061 = vmatpush1.msra.mxu0 %v938
    %1062 = vmatprep.subr.mxu0 %v937
    %1063 = vmatpush1.msra.mxu0 %v936
    %1064 = vmatprep.subr.mxu0 %v999
    %1065 = vmatpush2.msra.mxu0 %v998
    %1066 = vmatprep.subr.mxu0 %v997
    %1067 = vmatpush2.msra.mxu0 %v996
    %1068 = vmatprep.subr.mxu0 %v995
    %1069 = vmatpush2.msra.mxu0 %v994
    %1070 = vmatprep.subr.mxu0 %v993
    %1071 = vmatpush2.msra.mxu0 %v992
    %1072 = vmatprep.subr.mxu0 %v991
    %1073 = vmatpush2.msra.mxu0 %v990
    %1074 = vmatprep.subr.mxu0 %v989
    %1075 = vmatpush2.msra.mxu0 %v988
    %1076 = vmatprep.subr.mxu0 %v987
    %1077 = vmatpush2.msra.mxu0 %v986
    %1078 = vmatprep.subr.mxu0 %v985
    %1079 = vmatpush2.msra.mxu0 %v984
    %1080 = vmatprep.subr.mxu0 %v983
    %1081 = vmatpush2.msra.mxu0 %v982
    %1082 = vmatprep.subr.mxu0 %v981
    %1083 = vmatpush2.msra.mxu0 %v980
    %1084 = vmatprep.subr.mxu0 %v979
    %1085 = vmatpush2.msra.mxu0 %v978
    %1086 = vmatprep.subr.mxu0 %v977
    %1087 = vmatpush2.msra.mxu0 %v976
    %1088 = vmatprep.subr.mxu0 %v975
    %1089 = vmatpush2.msra.mxu0 %v974
    %1090 = vmatprep.subr.mxu0 %v973
    %1091 = vmatpush2.msra.mxu0 %v972
    %1092 = vmatprep.subr.mxu0 %v971
    %1093 = vmatpush2.msra.mxu0 %v970
    %1094 = vmatprep.subr.mxu0 %v969
    %1095 = vmatpush2.msra.mxu0 %v968
    %1096 = vmatprep.mubr.f32.mxu0 %v871
    %1097 = vmatmul.mubr.f32.gmra.mxu0 %v926
    %v1098 = vpop.f32.mrf.mxu0
    %v1099 = vadd.f32 0.0, %v1098
    %v1100 = vpop.f32.mrf.mxu0
    %v1101 = vadd.f32 0.0, %v1100
    %1102 = vmatprep.mubr.f32.mxu0 %v873
    %1103 = vmatmul.mubr.f32.gmra.mxu0 %v927
    %v1104 = vpop.f32.mrf.mxu0
    %v1105 = vadd.f32 0.0, %v1104
    %v1106 = vpop.f32.mrf.mxu0
    %v1107 = vadd.f32 0.0, %v1106
    %1108 = vdwg.mxu0
    %1109 = vmatprep.subr.mxu0 %v1031
    %1110 = vmatpush1.msra.mxu0 %v1030
    %1111 = vmatprep.subr.mxu0 %v1029
    %1112 = vmatpush1.msra.mxu0 %v1028
    %1113 = vmatprep.subr.mxu0 %v1027
    %1114 = vmatpush1.msra.mxu0 %v1026
    %1115 = vmatprep.subr.mxu0 %v1025
    %1116 = vmatpush1.msra.mxu0 %v1024
    %1117 = vmatprep.subr.mxu0 %v1023
    %1118 = vmatpush1.msra.mxu0 %v1022
    %1119 = vmatprep.subr.mxu0 %v1021
    %1120 = vmatpush1.msra.mxu0 %v1020
    %1121 = vmatprep.subr.mxu0 %v1019
    %1122 = vmatpush1.msra.mxu0 %v1018
    %1123 = vmatprep.subr.mxu0 %v1017
    %1124 = vmatpush1.msra.mxu0 %v1016
    %1125 = vmatprep.subr.mxu0 %v1015
    %1126 = vmatpush1.msra.mxu0 %v1014
    %1127 = vmatprep.subr.mxu0 %v1013
    %1128 = vmatpush1.msra.mxu0 %v1012
    %1129 = vmatprep.subr.mxu0 %v1011
    %1130 = vmatpush1.msra.mxu0 %v1010
    %1131 = vmatprep.subr.mxu0 %v1009
    %1132 = vmatpush1.msra.mxu0 %v1008
    %1133 = vmatprep.subr.mxu0 %v1007
    %1134 = vmatpush1.msra.mxu0 %v1006
    %1135 = vmatprep.subr.mxu0 %v1005
    %1136 = vmatpush1.msra.mxu0 %v1004
    %1137 = vmatprep.subr.mxu0 %v1003
    %1138 = vmatpush1.msra.mxu0 %v1002
    %1139 = vmatprep.subr.mxu0 %v1001
    %1140 = vmatpush1.msra.mxu0 %v1000
    %1141 = vmatprep.subr.mxu0 0.0
    %1142 = vmatpush2.msra.mxu0 0.0
    %1143 = vmatprep.subr.mxu0 0.0
    %1144 = vmatpush2.msra.mxu0 0.0
    %1145 = vmatprep.subr.mxu0 0.0
    %1146 = vmatpush2.msra.mxu0 0.0
    %1147 = vmatprep.subr.mxu0 0.0
    %1148 = vmatpush2.msra.mxu0 0.0
    %1149 = vmatprep.subr.mxu0 0.0
    %1150 = vmatpush2.msra.mxu0 0.0
    %1151 = vmatprep.subr.mxu0 0.0
    %1152 = vmatpush2.msra.mxu0 0.0
    %1153 = vmatprep.subr.mxu0 0.0
    %1154 = vmatpush2.msra.mxu0 0.0
    %1155 = vmatprep.subr.mxu0 0.0
    %1156 = vmatpush2.msra.mxu0 0.0
    %1157 = vmatprep.subr.mxu0 0.0
    %1158 = vmatpush2.msra.mxu0 0.0
    %1159 = vmatprep.subr.mxu0 0.0
    %1160 = vmatpush2.msra.mxu0 0.0
    %1161 = vmatprep.subr.mxu0 0.0
    %1162 = vmatpush2.msra.mxu0 0.0
    %1163 = vmatprep.subr.mxu0 0.0
    %1164 = vmatpush2.msra.mxu0 0.0
    %1165 = vmatprep.subr.mxu0 0.0
    %1166 = vmatpush2.msra.mxu0 0.0
    %1167 = vmatprep.subr.mxu0 0.0
    %1168 = vmatpush2.msra.mxu0 0.0
    %1169 = vmatprep.subr.mxu0 0.0
    %1170 = vmatpush2.msra.mxu0 0.0
    %1171 = vmatprep.subr.mxu0 0.0
    %1172 = vmatpush2.msra.mxu0 0.0
    %1173 = vmatprep.mubr.f32.mxu0 0.0
    %1174 = vmatmul.mubr.f32.gmra.mxu0 %v875
    %v1175 = vpop.f32.mrf.mxu0
    %v1176 = vadd.f32 %v1099, %v1175
    %v1177 = vpop.f32.mrf.mxu0
    %v1178 = vadd.f32 %v1101, %v1177
    %1179 = vmatprep.mubr.f32.mxu0 0.0
    %1180 = vmatmul.mubr.f32.gmra.mxu0 %v877
    %v1181 = vpop.f32.mrf.mxu0
    %v1182 = vadd.f32 %v1105, %v1181
    %v1183 = vpop.f32.mrf.mxu0
    %v1184 = vadd.f32 %v1107, %v1183
    %1185 = vdwg.mxu0
    %1186 = vmatprep.subr.mxu0 %v967
    %1187 = vmatpush1.msra.mxu0 %v966
    %1188 = vmatprep.subr.mxu0 %v965
    %1189 = vmatpush1.msra.mxu0 %v964
    %1190 = vmatprep.subr.mxu0 %v963
    %1191 = vmatpush1.msra.mxu0 %v962
    %1192 = vmatprep.subr.mxu0 %v961
    %1193 = vmatpush1.msra.mxu0 %v960
    %1194 = vmatprep.subr.mxu0 %v959
    %1195 = vmatpush1.msra.mxu0 %v958
    %1196 = vmatprep.subr.mxu0 %v957
    %1197 = vmatpush1.msra.mxu0 %v956
    %1198 = vmatprep.subr.mxu0 %v955
    %1199 = vmatpush1.msra.mxu0 %v954
    %1200 = vmatprep.subr.mxu0 %v953
    %1201 = vmatpush1.msra.mxu0 %v952
    %1202 = vmatprep.subr.mxu0 %v951
    %1203 = vmatpush1.msra.mxu0 %v950
    %1204 = vmatprep.subr.mxu0 %v949
    %1205 = vmatpush1.msra.mxu0 %v948
    %1206 = vmatprep.subr.mxu0 %v947
    %1207 = vmatpush1.msra.mxu0 %v946
    %1208 = vmatprep.subr.mxu0 %v945
    %1209 = vmatpush1.msra.mxu0 %v944
    %1210 = vmatprep.subr.mxu0 %v943
    %1211 = vmatpush1.msra.mxu0 %v942
    %1212 = vmatprep.subr.mxu0 %v941
    %1213 = vmatpush1.msra.mxu0 %v940
    %1214 = vmatprep.subr.mxu0 %v939
    %1215 = vmatpush1.msra.mxu0 %v938
    %1216 = vmatprep.subr.mxu0 %v937
    %1217 = vmatpush1.msra.mxu0 %v936
    %1218 = vmatprep.subr.mxu0 %v999
    %1219 = vmatpush2.msra.mxu0 %v998
    %1220 = vmatprep.subr.mxu0 %v997
    %1221 = vmatpush2.msra.mxu0 %v996
    %1222 = vmatprep.subr.mxu0 %v995
    %1223 = vmatpush2.msra.mxu0 %v994
    %1224 = vmatprep.subr.mxu0 %v993
    %1225 = vmatpush2.msra.mxu0 %v992
    %1226 = vmatprep.subr.mxu0 %v991
    %1227 = vmatpush2.msra.mxu0 %v990
    %1228 = vmatprep.subr.mxu0 %v989
    %1229 = vmatpush2.msra.mxu0 %v988
    %1230 = vmatprep.subr.mxu0 %v987
    %1231 = vmatpush2.msra.mxu0 %v986
    %1232 = vmatprep.subr.mxu0 %v985
    %1233 = vmatpush2.msra.mxu0 %v984
    %1234 = vmatprep.subr.mxu0 %v983
    %1235 = vmatpush2.msra.mxu0 %v982
    %1236 = vmatprep.subr.mxu0 %v981
    %1237 = vmatpush2.msra.mxu0 %v980
    %1238 = vmatprep.subr.mxu0 %v979
    %1239 = vmatpush2.msra.mxu0 %v978
    %1240 = vmatprep.subr.mxu0 %v977
    %1241 = vmatpush2.msra.mxu0 %v976
    %1242 = vmatprep.subr.mxu0 %v975
    %1243 = vmatpush2.msra.mxu0 %v974
    %1244 = vmatprep.subr.mxu0 %v973
    %1245 = vmatpush2.msra.mxu0 %v972
    %1246 = vmatprep.subr.mxu0 %v971
    %1247 = vmatpush2.msra.mxu0 %v970
    %1248 = vmatprep.subr.mxu0 %v969
    %1249 = vmatpush2.msra.mxu0 %v968
    %1250 = vmatprep.mubr.f32.mxu0 %v875
    %1251 = vmatmul.mubr.f32.gmra.mxu0 %v871
    %v1252 = vpop.f32.mrf.mxu0
    %v1253 = vadd.f32 0.0, %v1252
    %v1254 = vpop.f32.mrf.mxu0
    %v1255 = vadd.f32 0.0, %v1254
    %1256 = vmatprep.mubr.f32.mxu0 %v877
    %1257 = vmatmul.mubr.f32.gmra.mxu0 %v873
    %v1258 = vpop.f32.mrf.mxu0
    %v1259 = vadd.f32 0.0, %v1258
    %v1260 = vpop.f32.mrf.mxu0
    %v1261 = vadd.f32 0.0, %v1260
    %1262 = vdwg.mxu0
    %1263 = vmatprep.subr.mxu0 %v1031
    %1264 = vmatpush1.msra.mxu0 %v1030
    %1265 = vmatprep.subr.mxu0 %v1029
    %1266 = vmatpush1.msra.mxu0 %v1028
    %1267 = vmatprep.subr.mxu0 %v1027
    %1268 = vmatpush1.msra.mxu0 %v1026
    %1269 = vmatprep.subr.mxu0 %v1025
    %1270 = vmatpush1.msra.mxu0 %v1024
    %1271 = vmatprep.subr.mxu0 %v1023
    %1272 = vmatpush1.msra.mxu0 %v1022
    %1273 = vmatprep.subr.mxu0 %v1021
    %1274 = vmatpush1.msra.mxu0 %v1020
    %1275 = vmatprep.subr.mxu0 %v1019
    %1276 = vmatpush1.msra.mxu0 %v1018
    %1277 = vmatprep.subr.mxu0 %v1017
    %1278 = vmatpush1.msra.mxu0 %v1016
    %1279 = vmatprep.subr.mxu0 %v1015
    %1280 = vmatpush1.msra.mxu0 %v1014
    %1281 = vmatprep.subr.mxu0 %v1013
    %1282 = vmatpush1.msra.mxu0 %v1012
    %1283 = vmatprep.subr.mxu0 %v1011
    %1284 = vmatpush1.msra.mxu0 %v1010
    %1285 = vmatprep.subr.mxu0 %v1009
    %1286 = vmatpush1.msra.mxu0 %v1008
    %1287 = vmatprep.subr.mxu0 %v1007
    %1288 = vmatpush1.msra.mxu0 %v1006
    %1289 = vmatprep.subr.mxu0 %v1005
    %1290 = vmatpush1.msra.mxu0 %v1004
    %1291 = vmatprep.subr.mxu0 %v1003
    %1292 = vmatpush1.msra.mxu0 %v1002
    %1293 = vmatprep.subr.mxu0 %v1001
    %1294 = vmatpush1.msra.mxu0 %v1000
    %1295 = vmatprep.subr.mxu0 0.0
    %1296 = vmatpush2.msra.mxu0 0.0
    %1297 = vmatprep.subr.mxu0 0.0
    %1298 = vmatpush2.msra.mxu0 0.0
    %1299 = vmatprep.subr.mxu0 0.0
    %1300 = vmatpush2.msra.mxu0 0.0
    %1301 = vmatprep.subr.mxu0 0.0
    %1302 = vmatpush2.msra.mxu0 0.0
    %1303 = vmatprep.subr.mxu0 0.0
    %1304 = vmatpush2.msra.mxu0 0.0
    %1305 = vmatprep.subr.mxu0 0.0
    %1306 = vmatpush2.msra.mxu0 0.0
    %1307 = vmatprep.subr.mxu0 0.0
    %1308 = vmatpush2.msra.mxu0 0.0
    %1309 = vmatprep.subr.mxu0 0.0
    %1310 = vmatpush2.msra.mxu0 0.0
    %1311 = vmatprep.subr.mxu0 0.0
    %1312 = vmatpush2.msra.mxu0 0.0
    %1313 = vmatprep.subr.mxu0 0.0
    %1314 = vmatpush2.msra.mxu0 0.0
    %1315 = vmatprep.subr.mxu0 0.0
    %1316 = vmatpush2.msra.mxu0 0.0
    %1317 = vmatprep.subr.mxu0 0.0
    %1318 = vmatpush2.msra.mxu0 0.0
    %1319 = vmatprep.subr.mxu0 0.0
    %1320 = vmatpush2.msra.mxu0 0.0
    %1321 = vmatprep.subr.mxu0 0.0
    %1322 = vmatpush2.msra.mxu0 0.0
    %1323 = vmatprep.subr.mxu0 0.0
    %1324 = vmatpush2.msra.mxu0 0.0
    %1325 = vmatprep.subr.mxu0 0.0
    %1326 = vmatpush2.msra.mxu0 0.0
    %1327 = vmatprep.mubr.f32.mxu0 0.0
    %1328 = vmatmul.mubr.f32.gmra.mxu0 %v934
    %v1329 = vpop.f32.mrf.mxu0
    %v1330 = vadd.f32 %v1253, %v1329
    %v1331 = vpop.f32.mrf.mxu0
    %v1332 = vadd.f32 %v1255, %v1331
    %1333 = vmatprep.mubr.f32.mxu0 0.0
    %1334 = vmatmul.mubr.f32.gmra.mxu0 %v935
    %v1335 = vpop.f32.mrf.mxu0
    %v1336 = vadd.f32 %v1259, %v1335
    %v1337 = vpop.f32.mrf.mxu0
    %v1338 = vadd.f32 %v1261, %v1337
    %1339 = vdwg.mxu0
    %v1340 = vmax.f32 %v1176, %v1330
    %v1341 = vmax.f32 %v1178, %v1332
    %v1342 = vmax.f32 %v1182, %v1336
    %v1343 = vmax.f32 %v1184, %v1338
    %v1344 = vmax.f32 %v1340, %v1341
    %v1345 = vmax.f32 %v1342, %v1343
    %v1346 = vld [vmem:[%s4] sm:$0x1]
    %v1348 = vlaneseq
    %v1349 = vshrl.u32 %v1348, 7
    %v1350 = vsub.s32 0, %v1349
    %v1351 = vrot.slane %v1346, %v1350
    %v1353 = vadd.f32 %v1344, %v1351
    %v1354 = vadd.f32 %v1345, %v1351
    %v1355 = vmax.f32 %v1353, 0.0
    %v1356 = vmax.f32 %v1354, 0.0
    %1357 = vst [vmem:[#allocation3] sm:$0xff] %v1355
    %1358 = vst [vmem:[#allocation3 + $0x8] sm:$0x3f] %v1356
    %v1359 = vld [vmem:[#allocation3] ss:$7 sm:$0x3]
    %s1360 = scalar_lea.vmem [#allocation3], 1
    %v1361 = vld [vmem:[%s1360] ss:$7 sm:$0x3]
    %s1362 = scalar_lea.vmem [#allocation3], 2
    %v1363 = vld [vmem:[%s1362] ss:$7 sm:$0x3]
    %s1364 = scalar_lea.vmem [#allocation3], 3
    %v1365 = vld [vmem:[%s1364] ss:$7 sm:$0x3]
    %s1366 = scalar_lea.vmem [#allocation3], 4
    %v1367 = vld [vmem:[%s1366] ss:$7 sm:$0x3]
    %s1368 = scalar_lea.vmem [#allocation3], 5
    %v1369 = vld [vmem:[%s1368] ss:$7 sm:$0x3]
    %s1370 = scalar_lea.vmem [#allocation3], 6
    %v1371 = vld [vmem:[%s1370] ss:$7 sm:$0x3]
    %v1372 = vld [vmem:[#allocation9] sm:$0xff]
    %v1373 = vld [vmem:[#allocation9 + $0x8] sm:$0xff]
    %v1374 = vld [vmem:[#allocation9 + $0x10] sm:$0xff]
    %v1375 = vld [vmem:[#allocation9 + $0x18] sm:$0xff]
    %v1376 = vld [vmem:[#allocation9 + $0x20] sm:$0xff]
    %v1377 = vld [vmem:[#allocation9 + $0x28] sm:$0xff]
    %v1378 = vld [vmem:[#allocation9 + $0x30] sm:$0xff]
    %v1379 = vld [vmem:[#allocation9 + $0x38] sm:$0xff]
    %v1380 = vld [vmem:[#allocation9 + $0x40] sm:$0xff]
    %v1381 = vld [vmem:[#allocation9 + $0x48] sm:$0xff]
    %v1382 = vld [vmem:[#allocation9 + $0x50] sm:$0xff]
    %v1383 = vld [vmem:[#allocation9 + $0x58] sm:$0xff]
    %v1384 = vld [vmem:[#allocation9 + $0x60] sm:$0xff]
    %v1385 = vld [vmem:[#allocation9 + $0x68] sm:$0xff]
    %v1386 = vld [vmem:[#allocation9 + $0x70] sm:$0xff]
    %v1387 = vld [vmem:[#allocation9 + $0x78] sm:$0xff]
    %v1388 = vld [vmem:[#allocation9 + $0x80] sm:$0xff]
    %v1389 = vld [vmem:[#allocation9 + $0x88] sm:$0xff]
    %v1390 = vld [vmem:[#allocation9 + $0x90] sm:$0xff]
    %v1391 = vld [vmem:[#allocation9 + $0x98] sm:$0xff]
    %v1392 = vld [vmem:[#allocation9 + $0xa0] sm:$0xff]
    %v1393 = vld [vmem:[#allocation9 + $0xa8] sm:$0xff]
    %v1394 = vld [vmem:[#allocation9 + $0xb0] sm:$0xff]
    %v1395 = vld [vmem:[#allocation9 + $0xb8] sm:$0xff]
    %v1396 = vld [vmem:[#allocation9 + $0xc0] sm:$0xff]
    %v1397 = vld [vmem:[#allocation9 + $0xc8] sm:$0xff]
    %v1398 = vld [vmem:[#allocation9 + $0xd0] sm:$0xff]
    %v1399 = vld [vmem:[#allocation9 + $0xd8] sm:$0xff]
    %v1400 = vld [vmem:[#allocation9 + $0xe0] sm:$0xff]
    %v1401 = vld [vmem:[#allocation9 + $0xe8] sm:$0xff]
    %v1402 = vld [vmem:[#allocation9 + $0xf0] sm:$0xff]
    %v1403 = vld [vmem:[#allocation9 + $0xf8] sm:$0xff]
    %v1404 = vld [vmem:[#allocation9 + $0x100] sm:$0xff]
    %v1405 = vld [vmem:[#allocation9 + $0x108] sm:$0xff]
    %v1406 = vld [vmem:[#allocation9 + $0x110] sm:$0xff]
    %v1407 = vld [vmem:[#allocation9 + $0x118] sm:$0xff]
    %v1408 = vld [vmem:[#allocation9 + $0x120] sm:$0xff]
    %v1409 = vld [vmem:[#allocation9 + $0x128] sm:$0xff]
    %v1410 = vld [vmem:[#allocation9 + $0x130] sm:$0xff]
    %v1411 = vld [vmem:[#allocation9 + $0x138] sm:$0xff]
    %v1412 = vld [vmem:[#allocation9 + $0x140] sm:$0xff]
    %v1413 = vld [vmem:[#allocation9 + $0x148] sm:$0xff]
    %v1414 = vld [vmem:[#allocation9 + $0x150] sm:$0xff]
    %v1415 = vld [vmem:[#allocation9 + $0x158] sm:$0xff]
    %v1416 = vld [vmem:[#allocation9 + $0x160] sm:$0xff]
    %v1417 = vld [vmem:[#allocation9 + $0x168] sm:$0xff]
    %v1418 = vld [vmem:[#allocation9 + $0x170] sm:$0xff]
    %v1419 = vld [vmem:[#allocation9 + $0x178] sm:$0xff]
    %v1420 = vld [vmem:[#allocation9 + $0x180] sm:$0xff]
    %v1421 = vld [vmem:[#allocation9 + $0x188] sm:$0xff]
    %v1422 = vld [vmem:[#allocation9 + $0x190] sm:$0xff]
    %v1423 = vld [vmem:[#allocation9 + $0x198] sm:$0xff]
    %v1424 = vld [vmem:[#allocation9 + $0x1a0] sm:$0xff]
    %v1425 = vld [vmem:[#allocation9 + $0x1a8] sm:$0xff]
    %v1426 = vld [vmem:[#allocation9 + $0x1b0] sm:$0xff]
    %v1427 = vld [vmem:[#allocation9 + $0x1b8] sm:$0xff]
    %v1428 = vld [vmem:[#allocation9 + $0x1c0] sm:$0xff]
    %v1429 = vld [vmem:[#allocation9 + $0x1c8] sm:$0xff]
    %v1430 = vld [vmem:[#allocation9 + $0x1d0] sm:$0xff]
    %v1431 = vld [vmem:[#allocation9 + $0x1d8] sm:$0xff]
    %v1432 = vld [vmem:[#allocation9 + $0x1e0] sm:$0xff]
    %v1433 = vld [vmem:[#allocation9 + $0x1e8] sm:$0xff]
    %v1434 = vld [vmem:[#allocation9 + $0x1f0] sm:$0xff]
    %v1435 = vld [vmem:[#allocation9 + $0x1f8] sm:$0xff]
    %v1436 = vld [vmem:[#allocation9 + $0x200] sm:$0xff]
    %v1437 = vld [vmem:[#allocation9 + $0x208] sm:$0xff]
    %v1438 = vld [vmem:[#allocation9 + $0x210] sm:$0xff]
    %v1439 = vld [vmem:[#allocation9 + $0x218] sm:$0xff]
    %v1440 = vld [vmem:[#allocation9 + $0x220] sm:$0xff]
    %v1441 = vld [vmem:[#allocation9 + $0x228] sm:$0xff]
    %v1442 = vld [vmem:[#allocation9 + $0x230] sm:$0xff]
    %v1443 = vld [vmem:[#allocation9 + $0x238] sm:$0xff]
    %v1444 = vld [vmem:[#allocation9 + $0x240] sm:$0xff]
    %v1445 = vld [vmem:[#allocation9 + $0x248] sm:$0xff]
    %v1446 = vld [vmem:[#allocation9 + $0x250] sm:$0xff]
    %v1447 = vld [vmem:[#allocation9 + $0x258] sm:$0xff]
    %v1448 = vld [vmem:[#allocation9 + $0x260] sm:$0xff]
    %v1449 = vld [vmem:[#allocation9 + $0x268] sm:$0xff]
    %v1450 = vld [vmem:[#allocation9 + $0x270] sm:$0xff]
    %v1451 = vld [vmem:[#allocation9 + $0x278] sm:$0xff]
    %v1452 = vld [vmem:[#allocation9 + $0x280] sm:$0xff]
    %v1453 = vld [vmem:[#allocation9 + $0x288] sm:$0xff]
    %v1454 = vld [vmem:[#allocation9 + $0x290] sm:$0xff]
    %v1455 = vld [vmem:[#allocation9 + $0x298] sm:$0xff]
    %v1456 = vld [vmem:[#allocation9 + $0x2a0] sm:$0xff]
    %v1457 = vld [vmem:[#allocation9 + $0x2a8] sm:$0xff]
    %v1458 = vld [vmem:[#allocation9 + $0x2b0] sm:$0xff]
    %v1459 = vld [vmem:[#allocation9 + $0x2b8] sm:$0xff]
    %v1460 = vld [vmem:[#allocation9 + $0x2c0] sm:$0xff]
    %v1461 = vld [vmem:[#allocation9 + $0x2c8] sm:$0xff]
    %v1462 = vld [vmem:[#allocation9 + $0x2d0] sm:$0xff]
    %v1463 = vld [vmem:[#allocation9 + $0x2d8] sm:$0xff]
    %v1464 = vld [vmem:[#allocation9 + $0x2e0] sm:$0xff]
    %v1465 = vld [vmem:[#allocation9 + $0x2e8] sm:$0xff]
    %v1466 = vld [vmem:[#allocation9 + $0x2f0] sm:$0xff]
    %v1467 = vld [vmem:[#allocation9 + $0x2f8] sm:$0xff]
    %v1468 = vld [vmem:[#allocation9 + $0x300] sm:$0xff]
    %v1469 = vld [vmem:[#allocation9 + $0x308] sm:$0xff]
    %v1470 = vld [vmem:[#allocation9 + $0x310] sm:$0xff]
    %v1471 = vld [vmem:[#allocation9 + $0x318] sm:$0xff]
    %v1472 = vld [vmem:[#allocation9 + $0x320] sm:$0xff]
    %v1473 = vld [vmem:[#allocation9 + $0x328] sm:$0xff]
    %v1474 = vld [vmem:[#allocation9 + $0x330] sm:$0xff]
    %v1475 = vld [vmem:[#allocation9 + $0x338] sm:$0xff]
    %v1476 = vld [vmem:[#allocation9 + $0x340] sm:$0xff]
    %v1477 = vld [vmem:[#allocation9 + $0x348] sm:$0xff]
    %v1478 = vld [vmem:[#allocation9 + $0x350] sm:$0xff]
    %v1479 = vld [vmem:[#allocation9 + $0x358] sm:$0xff]
    %v1480 = vld [vmem:[#allocation9 + $0x360] sm:$0xff]
    %v1481 = vld [vmem:[#allocation9 + $0x368] sm:$0xff]
    %v1482 = vld [vmem:[#allocation9 + $0x370] sm:$0xff]
    %v1483 = vld [vmem:[#allocation9 + $0x378] sm:$0xff]
    %v1484 = vld [vmem:[%s6] sm:$0x1]
    %v1486 = vlaneseq
    %v1487 = vshrl.u32 %v1486, 7
    %v1488 = vsub.s32 0, %v1487
    %v1489 = vrot.slane %v1484, %v1488
    %1491 = vmatprep.subr.mxu0 0.0
    %1492 = vmatpush1.msra.mxu0 %v1387
    %1493 = vmatprep.subr.mxu0 0.0
    %1494 = vmatpush1.msra.mxu0 %v1386
    %1495 = vmatprep.subr.mxu0 0.0
    %1496 = vmatpush1.msra.mxu0 %v1385
    %1497 = vmatprep.subr.mxu0 0.0
    %1498 = vmatpush1.msra.mxu0 %v1384
    %1499 = vmatprep.subr.mxu0 0.0
    %1500 = vmatpush1.msra.mxu0 %v1383
    %1501 = vmatprep.subr.mxu0 0.0
    %1502 = vmatpush1.msra.mxu0 %v1382
    %1503 = vmatprep.subr.mxu0 0.0
    %1504 = vmatpush1.msra.mxu0 %v1381
    %1505 = vmatprep.subr.mxu0 0.0
    %1506 = vmatpush1.msra.mxu0 %v1380
    %1507 = vmatprep.subr.mxu0 0.0
    %1508 = vmatpush1.msra.mxu0 %v1379
    %1509 = vmatprep.subr.mxu0 0.0
    %1510 = vmatpush1.msra.mxu0 %v1378
    %1511 = vmatprep.subr.mxu0 0.0
    %1512 = vmatpush1.msra.mxu0 %v1377
    %1513 = vmatprep.subr.mxu0 0.0
    %1514 = vmatpush1.msra.mxu0 %v1376
    %1515 = vmatprep.subr.mxu0 0.0
    %1516 = vmatpush1.msra.mxu0 %v1375
    %1517 = vmatprep.subr.mxu0 0.0
    %1518 = vmatpush1.msra.mxu0 %v1374
    %1519 = vmatprep.subr.mxu0 0.0
    %1520 = vmatpush1.msra.mxu0 %v1373
    %1521 = vmatprep.subr.mxu0 0.0
    %1522 = vmatpush1.msra.mxu0 %v1372
    %1523 = vmatprep.subr.mxu0 0.0
    %1524 = vmatpush2.msra.mxu0 %v1403
    %1525 = vmatprep.subr.mxu0 0.0
    %1526 = vmatpush2.msra.mxu0 %v1402
    %1527 = vmatprep.subr.mxu0 0.0
    %1528 = vmatpush2.msra.mxu0 %v1401
    %1529 = vmatprep.subr.mxu0 0.0
    %1530 = vmatpush2.msra.mxu0 %v1400
    %1531 = vmatprep.subr.mxu0 0.0
    %1532 = vmatpush2.msra.mxu0 %v1399
    %1533 = vmatprep.subr.mxu0 0.0
    %1534 = vmatpush2.msra.mxu0 %v1398
    %1535 = vmatprep.subr.mxu0 0.0
    %1536 = vmatpush2.msra.mxu0 %v1397
    %1537 = vmatprep.subr.mxu0 0.0
    %1538 = vmatpush2.msra.mxu0 %v1396
    %1539 = vmatprep.subr.mxu0 0.0
    %1540 = vmatpush2.msra.mxu0 %v1395
    %1541 = vmatprep.subr.mxu0 0.0
    %1542 = vmatpush2.msra.mxu0 %v1394
    %1543 = vmatprep.subr.mxu0 0.0
    %1544 = vmatpush2.msra.mxu0 %v1393
    %1545 = vmatprep.subr.mxu0 0.0
    %1546 = vmatpush2.msra.mxu0 %v1392
    %1547 = vmatprep.subr.mxu0 0.0
    %1548 = vmatpush2.msra.mxu0 %v1391
    %1549 = vmatprep.subr.mxu0 0.0
    %1550 = vmatpush2.msra.mxu0 %v1390
    %1551 = vmatprep.subr.mxu0 0.0
    %1552 = vmatpush2.msra.mxu0 %v1389
    %1553 = vmatprep.subr.mxu0 0.0
    %1554 = vmatpush2.msra.mxu0 %v1388
    %1555 = vmatprep.mubr.f32.mxu0 %v1361
    %1556 = vmatmul.mubr.f32.gmra.mxu0 %v1359
    %v1557 = vpop.f32.mrf.mxu0
    %v1558 = vadd.f32 %v1489, %v1557
    %v1559 = vpop.f32.mrf.mxu0
    %1560 = vdwg.mxu0
    %1561 = vmatprep.subr.mxu0 0.0
    %1562 = vmatpush1.msra.mxu0 %v1419
    %1563 = vmatprep.subr.mxu0 0.0
    %1564 = vmatpush1.msra.mxu0 %v1418
    %1565 = vmatprep.subr.mxu0 0.0
    %1566 = vmatpush1.msra.mxu0 %v1417
    %1567 = vmatprep.subr.mxu0 0.0
    %1568 = vmatpush1.msra.mxu0 %v1416
    %1569 = vmatprep.subr.mxu0 0.0
    %1570 = vmatpush1.msra.mxu0 %v1415
    %1571 = vmatprep.subr.mxu0 0.0
    %1572 = vmatpush1.msra.mxu0 %v1414
    %1573 = vmatprep.subr.mxu0 0.0
    %1574 = vmatpush1.msra.mxu0 %v1413
    %1575 = vmatprep.subr.mxu0 0.0
    %1576 = vmatpush1.msra.mxu0 %v1412
    %1577 = vmatprep.subr.mxu0 0.0
    %1578 = vmatpush1.msra.mxu0 %v1411
    %1579 = vmatprep.subr.mxu0 0.0
    %1580 = vmatpush1.msra.mxu0 %v1410
    %1581 = vmatprep.subr.mxu0 0.0
    %1582 = vmatpush1.msra.mxu0 %v1409
    %1583 = vmatprep.subr.mxu0 0.0
    %1584 = vmatpush1.msra.mxu0 %v1408
    %1585 = vmatprep.subr.mxu0 0.0
    %1586 = vmatpush1.msra.mxu0 %v1407
    %1587 = vmatprep.subr.mxu0 0.0
    %1588 = vmatpush1.msra.mxu0 %v1406
    %1589 = vmatprep.subr.mxu0 0.0
    %1590 = vmatpush1.msra.mxu0 %v1405
    %1591 = vmatprep.subr.mxu0 0.0
    %1592 = vmatpush1.msra.mxu0 %v1404
    %1593 = vmatprep.subr.mxu0 0.0
    %1594 = vmatpush2.msra.mxu0 %v1435
    %1595 = vmatprep.subr.mxu0 0.0
    %1596 = vmatpush2.msra.mxu0 %v1434
    %1597 = vmatprep.subr.mxu0 0.0
    %1598 = vmatpush2.msra.mxu0 %v1433
    %1599 = vmatprep.subr.mxu0 0.0
    %1600 = vmatpush2.msra.mxu0 %v1432
    %1601 = vmatprep.subr.mxu0 0.0
    %1602 = vmatpush2.msra.mxu0 %v1431
    %1603 = vmatprep.subr.mxu0 0.0
    %1604 = vmatpush2.msra.mxu0 %v1430
    %1605 = vmatprep.subr.mxu0 0.0
    %1606 = vmatpush2.msra.mxu0 %v1429
    %1607 = vmatprep.subr.mxu0 0.0
    %1608 = vmatpush2.msra.mxu0 %v1428
    %1609 = vmatprep.subr.mxu0 0.0
    %1610 = vmatpush2.msra.mxu0 %v1427
    %1611 = vmatprep.subr.mxu0 0.0
    %1612 = vmatpush2.msra.mxu0 %v1426
    %1613 = vmatprep.subr.mxu0 0.0
    %1614 = vmatpush2.msra.mxu0 %v1425
    %1615 = vmatprep.subr.mxu0 0.0
    %1616 = vmatpush2.msra.mxu0 %v1424
    %1617 = vmatprep.subr.mxu0 0.0
    %1618 = vmatpush2.msra.mxu0 %v1423
    %1619 = vmatprep.subr.mxu0 0.0
    %1620 = vmatpush2.msra.mxu0 %v1422
    %1621 = vmatprep.subr.mxu0 0.0
    %1622 = vmatpush2.msra.mxu0 %v1421
    %1623 = vmatprep.subr.mxu0 0.0
    %1624 = vmatpush2.msra.mxu0 %v1420
    %1625 = vmatprep.mubr.f32.mxu0 %v1365
    %1626 = vmatmul.mubr.f32.gmra.mxu0 %v1363
    %v1627 = vpop.f32.mrf.mxu0
    %v1628 = vadd.f32 %v1558, %v1627
    %v1629 = vpop.f32.mrf.mxu0
    %1630 = vdwg.mxu0
    %1631 = vmatprep.subr.mxu0 0.0
    %1632 = vmatpush1.msra.mxu0 %v1451
    %1633 = vmatprep.subr.mxu0 0.0
    %1634 = vmatpush1.msra.mxu0 %v1450
    %1635 = vmatprep.subr.mxu0 0.0
    %1636 = vmatpush1.msra.mxu0 %v1449
    %1637 = vmatprep.subr.mxu0 0.0
    %1638 = vmatpush1.msra.mxu0 %v1448
    %1639 = vmatprep.subr.mxu0 0.0
    %1640 = vmatpush1.msra.mxu0 %v1447
    %1641 = vmatprep.subr.mxu0 0.0
    %1642 = vmatpush1.msra.mxu0 %v1446
    %1643 = vmatprep.subr.mxu0 0.0
    %1644 = vmatpush1.msra.mxu0 %v1445
    %1645 = vmatprep.subr.mxu0 0.0
    %1646 = vmatpush1.msra.mxu0 %v1444
    %1647 = vmatprep.subr.mxu0 0.0
    %1648 = vmatpush1.msra.mxu0 %v1443
    %1649 = vmatprep.subr.mxu0 0.0
    %1650 = vmatpush1.msra.mxu0 %v1442
    %1651 = vmatprep.subr.mxu0 0.0
    %1652 = vmatpush1.msra.mxu0 %v1441
    %1653 = vmatprep.subr.mxu0 0.0
    %1654 = vmatpush1.msra.mxu0 %v1440
    %1655 = vmatprep.subr.mxu0 0.0
    %1656 = vmatpush1.msra.mxu0 %v1439
    %1657 = vmatprep.subr.mxu0 0.0
    %1658 = vmatpush1.msra.mxu0 %v1438
    %1659 = vmatprep.subr.mxu0 0.0
    %1660 = vmatpush1.msra.mxu0 %v1437
    %1661 = vmatprep.subr.mxu0 0.0
    %1662 = vmatpush1.msra.mxu0 %v1436
    %1663 = vmatprep.subr.mxu0 0.0
    %1664 = vmatpush2.msra.mxu0 %v1467
    %1665 = vmatprep.subr.mxu0 0.0
    %1666 = vmatpush2.msra.mxu0 %v1466
    %1667 = vmatprep.subr.mxu0 0.0
    %1668 = vmatpush2.msra.mxu0 %v1465
    %1669 = vmatprep.subr.mxu0 0.0
    %1670 = vmatpush2.msra.mxu0 %v1464
    %1671 = vmatprep.subr.mxu0 0.0
    %1672 = vmatpush2.msra.mxu0 %v1463
    %1673 = vmatprep.subr.mxu0 0.0
    %1674 = vmatpush2.msra.mxu0 %v1462
    %1675 = vmatprep.subr.mxu0 0.0
    %1676 = vmatpush2.msra.mxu0 %v1461
    %1677 = vmatprep.subr.mxu0 0.0
    %1678 = vmatpush2.msra.mxu0 %v1460
    %1679 = vmatprep.subr.mxu0 0.0
    %1680 = vmatpush2.msra.mxu0 %v1459
    %1681 = vmatprep.subr.mxu0 0.0
    %1682 = vmatpush2.msra.mxu0 %v1458
    %1683 = vmatprep.subr.mxu0 0.0
    %1684 = vmatpush2.msra.mxu0 %v1457
    %1685 = vmatprep.subr.mxu0 0.0
    %1686 = vmatpush2.msra.mxu0 %v1456
    %1687 = vmatprep.subr.mxu0 0.0
    %1688 = vmatpush2.msra.mxu0 %v1455
    %1689 = vmatprep.subr.mxu0 0.0
    %1690 = vmatpush2.msra.mxu0 %v1454
    %1691 = vmatprep.subr.mxu0 0.0
    %1692 = vmatpush2.msra.mxu0 %v1453
    %1693 = vmatprep.subr.mxu0 0.0
    %1694 = vmatpush2.msra.mxu0 %v1452
    %1695 = vmatprep.mubr.f32.mxu0 %v1369
    %1696 = vmatmul.mubr.f32.gmra.mxu0 %v1367
    %v1697 = vpop.f32.mrf.mxu0
    %v1698 = vadd.f32 %v1628, %v1697
    %v1699 = vpop.f32.mrf.mxu0
    %1700 = vdwg.mxu0
    %1701 = vmatprep.subr.mxu0 0.0
    %1702 = vmatpush1.msra.mxu0 %v1483
    %1703 = vmatprep.subr.mxu0 0.0
    %1704 = vmatpush1.msra.mxu0 %v1482
    %1705 = vmatprep.subr.mxu0 0.0
    %1706 = vmatpush1.msra.mxu0 %v1481
    %1707 = vmatprep.subr.mxu0 0.0
    %1708 = vmatpush1.msra.mxu0 %v1480
    %1709 = vmatprep.subr.mxu0 0.0
    %1710 = vmatpush1.msra.mxu0 %v1479
    %1711 = vmatprep.subr.mxu0 0.0
    %1712 = vmatpush1.msra.mxu0 %v1478
    %1713 = vmatprep.subr.mxu0 0.0
    %1714 = vmatpush1.msra.mxu0 %v1477
    %1715 = vmatprep.subr.mxu0 0.0
    %1716 = vmatpush1.msra.mxu0 %v1476
    %1717 = vmatprep.subr.mxu0 0.0
    %1718 = vmatpush1.msra.mxu0 %v1475
    %1719 = vmatprep.subr.mxu0 0.0
    %1720 = vmatpush1.msra.mxu0 %v1474
    %1721 = vmatprep.subr.mxu0 0.0
    %1722 = vmatpush1.msra.mxu0 %v1473
    %1723 = vmatprep.subr.mxu0 0.0
    %1724 = vmatpush1.msra.mxu0 %v1472
    %1725 = vmatprep.subr.mxu0 0.0
    %1726 = vmatpush1.msra.mxu0 %v1471
    %1727 = vmatprep.subr.mxu0 0.0
    %1728 = vmatpush1.msra.mxu0 %v1470
    %1729 = vmatprep.subr.mxu0 0.0
    %1730 = vmatpush1.msra.mxu0 %v1469
    %1731 = vmatprep.subr.mxu0 0.0
    %1732 = vmatpush1.msra.mxu0 %v1468
    %1733 = vmatprep.subr.mxu0 0.0
    %1734 = vmatpush2.msra.mxu0 0.0
    %1735 = vmatprep.subr.mxu0 0.0
    %1736 = vmatpush2.msra.mxu0 0.0
    %1737 = vmatprep.subr.mxu0 0.0
    %1738 = vmatpush2.msra.mxu0 0.0
    %1739 = vmatprep.subr.mxu0 0.0
    %1740 = vmatpush2.msra.mxu0 0.0
    %1741 = vmatprep.subr.mxu0 0.0
    %1742 = vmatpush2.msra.mxu0 0.0
    %1743 = vmatprep.subr.mxu0 0.0
    %1744 = vmatpush2.msra.mxu0 0.0
    %1745 = vmatprep.subr.mxu0 0.0
    %1746 = vmatpush2.msra.mxu0 0.0
    %1747 = vmatprep.subr.mxu0 0.0
    %1748 = vmatpush2.msra.mxu0 0.0
    %1749 = vmatprep.subr.mxu0 0.0
    %1750 = vmatpush2.msra.mxu0 0.0
    %1751 = vmatprep.subr.mxu0 0.0
    %1752 = vmatpush2.msra.mxu0 0.0
    %1753 = vmatprep.subr.mxu0 0.0
    %1754 = vmatpush2.msra.mxu0 0.0
    %1755 = vmatprep.subr.mxu0 0.0
    %1756 = vmatpush2.msra.mxu0 0.0
    %1757 = vmatprep.subr.mxu0 0.0
    %1758 = vmatpush2.msra.mxu0 0.0
    %1759 = vmatprep.subr.mxu0 0.0
    %1760 = vmatpush2.msra.mxu0 0.0
    %1761 = vmatprep.subr.mxu0 0.0
    %1762 = vmatpush2.msra.mxu0 0.0
    %1763 = vmatprep.subr.mxu0 0.0
    %1764 = vmatpush2.msra.mxu0 0.0
    %1765 = vmatprep.mubr.f32.mxu0 0.0
    %1766 = vmatmul.mubr.f32.gmra.mxu0 %v1371
    %v1767 = vpop.f32.mrf.mxu0
    %v1768 = vadd.f32 %v1698, %v1767
    %v1769 = vpop.f32.mrf.mxu0
    %1770 = vdwg.mxu0
    %1771 = vst [vmem:[#allocation10] sm:$0x3] %v1768
    // Predicated region
    $region42: #{cnn_forward.1} parent=1 // pred_check
      _
    $region43: #{cnn_forward.1} parent=1 // pred_check_branch
      %1773 = sbr.rel (0) target = $region45
    $region44: #{cnn_forward.1} parent=1 // pred_region
      %s1775 = ssub.s32 32, 32
      %1776 = vsyncadd [#allocation6], %s1775
      %s1778 = sshll.u32 [#allocation10], 4
      %s1779 = int_to_ptr.vmem [resolvable:$true] %s1778
      %1781 = dma.vmem_to_hbm [thread:$0]  %s1779, 32, %s7, [#allocation6]
    $region45: #{cnn_forward.1} parent=1 // pred_fallthru
      _
    // Predicated region
    $region46: #{cnn_forward.1} parent=1 // pred_check
      _
    $region47: #{cnn_forward.1} parent=1 // pred_check_branch
      %1783 = sbr.rel (0) target = $region49
    $region48: #{cnn_forward.1} parent=1 // pred_region
      %1784 = dma.done [#allocation6], 32
    $region49: #{cnn_forward.1} parent=1 // pred_fallthru
      _
    %1785 = vsyncpa [#allocation5], 1
    %1786 = vsyncpa [#allocation8], 1
    %1787 = vsyncpa [#allocation6], 1

</llo_original>
